<compile_context>
chip_gen: v7x
topology: tpu7x:2x2x1
jax: 0.10.0
libtpu: 0.0.40
codegen_flags: <defaults>
</compile_context>

<pallas_src>
import functools

import jax
import jax.numpy as jnp
import numpy as np
from jax.experimental import pallas as pl
from jax.experimental.pallas import tpu as pltpu

EPS = 1e-5      # BatchNorm2d default eps
_LANES = 128    # lane-dense slab width used by every layer


# ---------------------------------------------------------------------------
# Fused Pallas kernel
# ---------------------------------------------------------------------------
def _generator_kernel(x_ref, w1_ref,
                      l2_ref, r2_ref, l3_ref, r3_ref, l4_ref, r4_ref,
                      p_ref, t_ref, gb_ref, o_ref):
    f32 = jnp.float32
    bf16 = jnp.bfloat16
    n = x_ref.shape[0]                      # batch (static at trace time)

    def split_rows(hwide, cols):
        # (R, k*cols) -> (k*R, cols): stack the kh column blocks along sublanes
        # (static 128-aligned lane slices + sublane concat; no MXU work).
        k = hwide.shape[1] // cols
        return jnp.concatenate(
            [hwide[:, i * cols:(i + 1) * cols] for i in range(k)], axis=0)

    def conv_t(x, l_ref, r_ref):
        # ConvTranspose2d on a (H*N, W*Cin) slab in exactly two MXU ops:
        #   Hwide = X @ Rcat    (all kh taps + channel mixing, wide output)
        #   Y     = Lcat @ Hcat (row placement + kh summation, bf16 0/1 Lcat)
        k = l_ref.shape[1] // x.shape[0]
        cols = r_ref.shape[1] // k
        hwide = jnp.dot(x.astype(bf16), r_ref[...], preferred_element_type=f32)
        hcat = split_rows(hwide, cols).astype(bf16)
        return jnp.dot(l_ref[...], hcat, preferred_element_type=f32)

    def bn_relu(y, i):
        # BatchNorm2d (training-mode batch stats, biased variance) + ReLU on a
        # (H*N, W*C) slab.  One batched pooling dot (sum & sum-of-squares) and
        # one batched broadcast dot (scale & shift).  Padded channels in P/T/gb
        # are zero -> they contribute nothing and produce no NaNs.
        width = y.shape[0] // n                                # W (= H, square)
        count = y.shape[0] * width                             # N*H*W
        stats = jnp.concatenate(
            [jnp.sum(y, axis=0, keepdims=True),
             jnp.sum(y * y, axis=0, keepdims=True)], axis=0)   # (2, W*C)
        pooled = jnp.dot(stats, p_ref[i], preferred_element_type=f32)  # (2, Cmax)
        inv = 1.0 / count
        mean = pooled[0:1] * inv
        var = pooled[1:2] * inv - mean * mean
        gb = gb_ref[i]                                         # (2, Cmax): gamma/beta
        scale = gb[0:1] * jax.lax.rsqrt(var + EPS)
        shift = gb[1:2] - mean * scale
        ss = jnp.concatenate([scale, shift], axis=0)           # (2, Cmax)
        ssf = jnp.dot(ss, t_ref[i], preferred_element_type=f32)  # (2, W*C)
        return jnp.maximum(y * ssf[0:1] + ssf[1:2], 0.0)

    # Layer 1: 1x1 spatial input -> ConvTranspose degenerates to ONE matmul;
    # the row placement is the identity, so only a sublane restack remains.
    h1 = jnp.dot(x_ref[...].astype(bf16), w1_ref[...],
                 preferred_element_type=f32)                   # (N, OH*128)
    y = bn_relu(split_rows(h1, _LANES), 0)                     # (4N, 128)
    y = bn_relu(conv_t(y, l2_ref, r2_ref), 1)                  # (8N, 128)
    y = bn_relu(conv_t(y, l3_ref, r3_ref), 2)                  # (16N, 128)
    o_ref[...] = jnp.tanh(conv_t(y, l4_ref, r4_ref))           # (28N, 128)


# ---------------------------------------------------------------------------
# Host-side (one-time) folding of ConvTranspose2d weights into (Lcat, Rcat)
# ---------------------------------------------------------------------------
def _conv_transpose_cat_ops(w, ih, iw, stride, pad, batch, lane_pad=False):
    """ConvTranspose2d == Lcat @ vstack_kh(X @ R[kh]) on (H*N, W*C) slabs.

    w: PyTorch ConvTranspose2d weight (Cin, Cout, k, k), numpy.
    Lcat: (OH*N, k*IH*N) 0/1 row-placement + kh-sum matrix (rows (oh, n)).
    Rcat: (IW*Cin, k*cols) horizontal taps + channel mixing (bf16);
          cols = OW*Cout, lane-padded to 128 if requested.
    """
    cin, cout, k, _ = w.shape
    oh = (ih - 1) * stride - 2 * pad + k
    ow = (iw - 1) * stride - 2 * pad + k
    out_cols = ow * cout
    cols = ((out_cols + _LANES - 1) // _LANES) * _LANES if lane_pad else out_cols
    eye = np.eye(batch, dtype=np.float32)
    l_blocks, r_blocks = [], []
    for kh in range(k):
        l = np.zeros((oh, ih), np.float32)
        for i in range(ih):
            o = i * stride - pad + kh
            if 0 <= o < oh:
                l[o, i] = 1.0
        r = np.zeros((iw * cin, cols), np.float32)
        for i in range(iw):
            for o in range(ow):
                kw = o - i * stride + pad
                if 0 <= kw < k:
                    r[i * cin:(i + 1) * cin, o * cout:(o + 1) * cout] = \
                        w[:, :, kh, kw]
        l_blocks.append(np.kron(l, eye))          # rows (oh, n), cols (ih, n)
        r_blocks.append(r)
    lcat = np.concatenate(l_blocks, axis=1)       # (OH*N, k*IH*N)
    rcat = np.concatenate(r_blocks, axis=1)       # (IW*Cin, k*cols)
    return (jnp.asarray(lcat, jnp.bfloat16), jnp.asarray(rcat, jnp.bfloat16),
            oh, ow, cols)


def _bn_pool_ops(layers, cmax):
    """Per-layer 0/1 pooling P (W*C, Cmax) and broadcast T (Cmax, W*C),
    zero-padded to a common Cmax so one stacked operand serves all layers."""
    ps, ts = [], []
    for width, ch in layers:
        p = np.zeros((width * ch, cmax), np.float32)
        for w in range(width):
            p[w * ch:(w + 1) * ch, :ch] = np.eye(ch, dtype=np.float32)
        ps.append(p)
        ts.append(p.T.copy())
    return (jnp.asarray(np.stack(ps), jnp.float32),
            jnp.asarray(np.stack(ts), jnp.float32))


class GeneratorParams:
    """Deterministic init (PyTorch weight shapes; BN weight=1, bias=0).
    All conv weights are folded into (Lcat, Rcat) operator form once; BN
    pool/broadcast matrices and gamma/beta are stacked into padded operands."""

    def __init__(self, key, nz, ngf, nc, batch):
        ks = jax.random.split(key, 4)
        init = lambda k_, s: np.asarray(
            0.02 * jax.random.normal(k_, s, jnp.float32))
        w1 = init(ks[0], (nz, ngf * 4, 4, 4))        # ConvT(nz,    ngf*4, 4,1,0)
        w2 = init(ks[1], (ngf * 4, ngf * 2, 4, 4))   # ConvT(ngf*4, ngf*2, 4,2,1)
        w3 = init(ks[2], (ngf * 2, ngf, 4, 4))       # ConvT(ngf*2, ngf,   4,2,1)
        w4 = init(ks[3], (ngf, nc, 2, 2))            # ConvT(ngf,   nc,    2,2,2)

        # Layer 1 (1x1 input): one (nz, OH*OW*Cout) matrix, columns (oh, ow, c).
        w1mat = np.transpose(w1, (0, 2, 3, 1)).reshape(nz, 4 * 4 * ngf * 4)
        h1 = s1 = 4

        l2, r2, h2, s2, _ = _conv_transpose_cat_ops(w2, h1, s1, 2, 1, batch)
        l3, r3, h3, s3, _ = _conv_transpose_cat_ops(w3, h2, s2, 2, 1, batch)
        l4, r4, h4, _, cols4 = _conv_transpose_cat_ops(w4, h3, s3, 2, 2, batch,
                                                       lane_pad=True)

        cmax = ngf * 4
        p_all, t_all = _bn_pool_ops(
            [(s1, ngf * 4), (s2, ngf * 2), (s3, ngf)], cmax)
        gb = np.zeros((3, 2, cmax), np.float32)      # row 0 gamma, row 1 beta
        gb[0, 0, :ngf * 4] = 1.0
        gb[1, 0, :ngf * 2] = 1.0
        gb[2, 0, :ngf] = 1.0

        self.operands = (
            jnp.asarray(w1mat, jnp.bfloat16),
            l2, r2, l3, r3, l4, r4,
            p_all, t_all, jnp.asarray(gb, jnp.float32),
        )
        self.raw_weights = (jnp.asarray(w1), jnp.asarray(w2),
                            jnp.asarray(w3), jnp.asarray(w4))
        self.nc = nc
        self.out_size = h4        # 28
        self.out_cols = cols4     # 128 (lane-padded output slab width)


# ---------------------------------------------------------------------------
# Forward wrapper (single jit, single pallas_call)
# ---------------------------------------------------------------------------
@functools.partial(jax.jit, static_argnames=("nc", "out_size", "out_cols"))
def _generator_apply(operands, x_nchw, nc, out_size, out_cols):
    n = x_nchw.shape[0]
    x2d = x_nchw.reshape(n, -1)                       # (N, nz); 1x1 spatial
    vmem = pl.BlockSpec(memory_space=pltpu.MemorySpace.VMEM)
    out2d = pl.pallas_call(
        _generator_kernel,
        out_shape=jax.ShapeDtypeStruct((n * out_size, out_cols), jnp.float32),
        in_specs=[vmem] * (1 + len(operands)),
        out_specs=vmem,
    )(x2d, *operands)
    # rows are (oh, n), columns (ow, c): drop lane padding, go to NCHW.
    img = out2d[:, :out_size * nc].reshape(out_size, n, out_size, nc)
    return jnp.transpose(img, (1, 3, 0, 2))


def generator_forward(params, inp_nchw):
    return _generator_apply(params.operands, inp_nchw, nc=params.nc,
                            out_size=params.out_size, out_cols=params.out_cols)


# ---------------------------------------------------------------------------
# Pure-JAX reference (PyTorch semantics) for a numerical sanity check
# ---------------------------------------------------------------------------
def _reference_generator(x, weights):
    w1, w2, w3, w4 = weights

    def conv_t(x, w, stride, pad):
        k = w.shape[2]
        wf = jnp.transpose(w, (1, 0, 2, 3))[:, :, ::-1, ::-1]
        y = jax.lax.conv_general_dilated(
            x, wf, window_strides=(1, 1), padding=[(k - 1, k - 1)] * 2,
            lhs_dilation=(stride, stride),
            dimension_numbers=("NCHW", "OIHW", "NCHW"))
        if pad:
            y = y[:, :, pad:y.shape[2] - pad, pad:y.shape[3] - pad]
        return y

    def bn_relu(y):
        mean = jnp.mean(y, axis=(0, 2, 3), keepdims=True)
        var = jnp.mean((y - mean) ** 2, axis=(0, 2, 3), keepdims=True)
        return jnp.maximum((y - mean) * jax.lax.rsqrt(var + EPS), 0.0)

    y = bn_relu(conv_t(x, w1, 1, 0))
    y = bn_relu(conv_t(y, w2, 2, 1))
    y = bn_relu(conv_t(y, w3, 2, 1))
    return jnp.tanh(conv_t(y, w4, 2, 2))


if __name__ == "__main__":
    nz, ngf, nc, batch = 16, 8, 1, 2
    key = jax.random.PRNGKey(0)
    pkey, xkey = jax.random.split(key)
    params = GeneratorParams(pkey, nz, ngf, nc, batch)
    inp = jax.random.normal(xkey, (batch, nz, 1, 1), jnp.float32)

    out = jax.block_until_ready(generator_forward(params, inp))

    assert out.shape == (batch, nc, 28, 28), out.shape
    assert bool(jnp.all(jnp.isfinite(out)))
    assert bool(jnp.all(jnp.abs(out) <= 1.0 + 1e-6))    # tanh range

    ref = jax.block_until_ready(_reference_generator(inp, params.raw_weights))
    scale = float(jnp.max(jnp.abs(ref))) + 1e-6
    err = float(jnp.max(jnp.abs(out - ref)))
    # bf16 matmul operands vs PyTorch's f32 convs -> allow a loose tolerance.
    assert err <= 0.15 * scale, f"max|out-ref|={err:.5f}, scale={scale:.5f}"
    print("KERNEL_OK")
</pallas_src>

<mosaic_0001>
module attributes {stable_mosaic.version = 11 : i64} {
  func.func @_generator_kernel(%arg0: memref<2x16xf32, #tpu.memory_space<vmem>>, %arg1: memref<16x512xbf16, #tpu.memory_space<vmem>>, %arg2: memref<16x32xbf16, #tpu.memory_space<vmem>>, %arg3: memref<128x512xbf16, #tpu.memory_space<vmem>>, %arg4: memref<32x64xbf16, #tpu.memory_space<vmem>>, %arg5: memref<128x512xbf16, #tpu.memory_space<vmem>>, %arg6: memref<56x64xbf16, #tpu.memory_space<vmem>>, %arg7: memref<128x256xbf16, #tpu.memory_space<vmem>>, %arg8: memref<3x128x32xf32, #tpu.memory_space<vmem>>, %arg9: memref<3x32x128xf32, #tpu.memory_space<vmem>>, %arg10: memref<3x2x32xf32, #tpu.memory_space<vmem>>, %arg11: memref<56x128xf32, #tpu.memory_space<vmem>>) attributes {dimension_semantics = [], scalar_prefetch = 0 : i64, scratch_operands = 0 : i64, tpu.core_type = #tpu.core_type<tc>} {
    %c0 = arith.constant 0 : index
    %c0_0 = arith.constant 0 : index
    %0 = vector.load %arg0[%c0, %c0_0] : memref<2x16xf32, #tpu.memory_space<vmem>>, vector<2x16xf32>
    %1 = arith.truncf %0 : vector<2x16xf32> to vector<2x16xbf16>
    %c0_1 = arith.constant 0 : index
    %c0_2 = arith.constant 0 : index
    %2 = vector.load %arg1[%c0_1, %c0_2] : memref<16x512xbf16, #tpu.memory_space<vmem>>, vector<16x512xbf16>
    %cst = arith.constant dense<0.000000e+00> : vector<2x512xf32>
    %3 = tpu.matmul %1, %2, %cst {dimension_numbers = #tpu.dot_dimension_numbers<[1], [0], [0], [1], [0, 0, 1, 1], [], []>} : vector<2x16xbf16>, vector<16x512xbf16>, vector<2x512xf32> -> vector<2x512xf32>
    %4 = vector.extract_strided_slice %3 {offsets = [0, 0], sizes = [2, 128], strides = [1, 1]} : vector<2x512xf32> to vector<2x128xf32>
    %5 = vector.extract_strided_slice %3 {offsets = [0, 128], sizes = [2, 128], strides = [1, 1]} : vector<2x512xf32> to vector<2x128xf32>
    %6 = vector.extract_strided_slice %3 {offsets = [0, 256], sizes = [2, 128], strides = [1, 1]} : vector<2x512xf32> to vector<2x128xf32>
    %7 = vector.extract_strided_slice %3 {offsets = [0, 384], sizes = [2, 128], strides = [1, 1]} : vector<2x512xf32> to vector<2x128xf32>
    %8 = tpu.concatenate %4, %5, %6, %7 in 0 : vector<2x128xf32>, vector<2x128xf32>, vector<2x128xf32>, vector<2x128xf32> -> vector<8x128xf32>
    %cst_3 = arith.constant dense<0.000000e+00> : vector<128xf32>
    %9 = vector.multi_reduction <add>, %8, %cst_3 [0] : vector<8x128xf32> to vector<128xf32>
    %10 = vector.shape_cast %9 : vector<128xf32> to vector<1x128xf32>
    %11 = arith.mulf %8, %8 : vector<8x128xf32>
    %cst_4 = arith.constant dense<0.000000e+00> : vector<128xf32>
    %12 = vector.multi_reduction <add>, %11, %cst_4 [0] : vector<8x128xf32> to vector<128xf32>
    %13 = vector.shape_cast %12 : vector<128xf32> to vector<1x128xf32>
    %14 = tpu.concatenate %10, %13 in 0 : vector<1x128xf32>, vector<1x128xf32> -> vector<2x128xf32>
    %c0_5 = arith.constant 0 : index
    %c0_6 = arith.constant 0 : index
    %c0_7 = arith.constant 0 : index
    %15 = vector.load %arg8[%c0_5, %c0_6, %c0_7] : memref<3x128x32xf32, #tpu.memory_space<vmem>>, vector<1x128x32xf32>
    %16 = vector.shape_cast %15 : vector<1x128x32xf32> to vector<128x32xf32>
    %cst_8 = arith.constant dense<0.000000e+00> : vector<2x32xf32>
    %17 = tpu.matmul %14, %16, %cst_8 {dimension_numbers = #tpu.dot_dimension_numbers<[1], [0], [0], [1], [0, 0, 1, 1], [], []>} : vector<2x128xf32>, vector<128x32xf32>, vector<2x32xf32> -> vector<2x32xf32>
    %18 = vector.extract_strided_slice %17 {offsets = [0, 0], sizes = [1, 32], strides = [1, 1]} : vector<2x32xf32> to vector<1x32xf32>
    %cst_9 = arith.constant 3.125000e-02 : f32
    %19 = vector.broadcast %cst_9 : f32 to vector<1x32xf32>
    %20 = arith.mulf %18, %19 : vector<1x32xf32>
    %21 = vector.extract_strided_slice %17 {offsets = [1, 0], sizes = [1, 32], strides = [1, 1]} : vector<2x32xf32> to vector<1x32xf32>
    %cst_10 = arith.constant 3.125000e-02 : f32
    %22 = vector.broadcast %cst_10 : f32 to vector<1x32xf32>
    %23 = arith.mulf %21, %22 : vector<1x32xf32>
    %24 = arith.mulf %20, %20 : vector<1x32xf32>
    %25 = arith.subf %23, %24 : vector<1x32xf32>
    %c0_11 = arith.constant 0 : index
    %c0_12 = arith.constant 0 : index
    %c0_13 = arith.constant 0 : index
    %26 = vector.load %arg10[%c0_11, %c0_12, %c0_13] : memref<3x2x32xf32, #tpu.memory_space<vmem>>, vector<1x2x32xf32>
    %27 = vector.shape_cast %26 : vector<1x2x32xf32> to vector<2x32xf32>
    %28 = vector.extract_strided_slice %27 {offsets = [0, 0], sizes = [1, 32], strides = [1, 1]} : vector<2x32xf32> to vector<1x32xf32>
    %cst_14 = arith.constant 9.99999974E-6 : f32
    %29 = vector.broadcast %cst_14 : f32 to vector<1x32xf32>
    %30 = arith.addf %25, %29 : vector<1x32xf32>
    %31 = math.rsqrt %30 : vector<1x32xf32>
    %32 = arith.mulf %28, %31 : vector<1x32xf32>
    %33 = vector.extract_strided_slice %27 {offsets = [1, 0], sizes = [1, 32], strides = [1, 1]} : vector<2x32xf32> to vector<1x32xf32>
    %34 = arith.mulf %20, %32 : vector<1x32xf32>
    %35 = arith.subf %33, %34 : vector<1x32xf32>
    %36 = tpu.concatenate %32, %35 in 0 : vector<1x32xf32>, vector<1x32xf32> -> vector<2x32xf32>
    %c0_15 = arith.constant 0 : index
    %c0_16 = arith.constant 0 : index
    %c0_17 = arith.constant 0 : index
    %37 = vector.load %arg9[%c0_15, %c0_16, %c0_17] : memref<3x32x128xf32, #tpu.memory_space<vmem>>, vector<1x32x128xf32>
    %38 = vector.shape_cast %37 : vector<1x32x128xf32> to vector<32x128xf32>
    %cst_18 = arith.constant dense<0.000000e+00> : vector<2x128xf32>
    %39 = tpu.matmul %36, %38, %cst_18 {dimension_numbers = #tpu.dot_dimension_numbers<[1], [0], [0], [1], [0, 0, 1, 1], [], []>} : vector<2x32xf32>, vector<32x128xf32>, vector<2x128xf32> -> vector<2x128xf32>
    %40 = vector.extract_strided_slice %39 {offsets = [0, 0], sizes = [1, 128], strides = [1, 1]} : vector<2x128xf32> to vector<1x128xf32>
    %41 = vector.broadcast %40 : vector<1x128xf32> to vector<8x128xf32>
    %42 = arith.mulf %8, %41 : vector<8x128xf32>
    %43 = vector.extract_strided_slice %39 {offsets = [1, 0], sizes = [1, 128], strides = [1, 1]} : vector<2x128xf32> to vector<1x128xf32>
    %44 = vector.broadcast %43 : vector<1x128xf32> to vector<8x128xf32>
    %45 = arith.addf %42, %44 : vector<8x128xf32>
    %cst_19 = arith.constant 0.000000e+00 : f32
    %46 = vector.broadcast %cst_19 : f32 to vector<8x128xf32>
    %47 = arith.maximumf %45, %46 : vector<8x128xf32>
    %48 = arith.truncf %47 : vector<8x128xf32> to vector<8x128xbf16>
    %c0_20 = arith.constant 0 : index
    %c0_21 = arith.constant 0 : index
    %49 = vector.load %arg3[%c0_20, %c0_21] : memref<128x512xbf16, #tpu.memory_space<vmem>>, vector<128x512xbf16>
    %cst_22 = arith.constant dense<0.000000e+00> : vector<8x512xf32>
    %50 = tpu.matmul %48, %49, %cst_22 {dimension_numbers = #tpu.dot_dimension_numbers<[1], [0], [0], [1], [0, 0, 1, 1], [], []>} : vector<8x128xbf16>, vector<128x512xbf16>, vector<8x512xf32> -> vector<8x512xf32>
    %51 = vector.extract_strided_slice %50 {offsets = [0, 0], sizes = [8, 128], strides = [1, 1]} : vector<8x512xf32> to vector<8x128xf32>
    %52 = vector.extract_strided_slice %50 {offsets = [0, 128], sizes = [8, 128], strides = [1, 1]} : vector<8x512xf32> to vector<8x128xf32>
    %53 = vector.extract_strided_slice %50 {offsets = [0, 256], sizes = [8, 128], strides = [1, 1]} : vector<8x512xf32> to vector<8x128xf32>
    %54 = vector.extract_strided_slice %50 {offsets = [0, 384], sizes = [8, 128], strides = [1, 1]} : vector<8x512xf32> to vector<8x128xf32>
    %55 = tpu.concatenate %51, %52, %53, %54 in 0 : vector<8x128xf32>, vector<8x128xf32>, vector<8x128xf32>, vector<8x128xf32> -> vector<32x128xf32>
    %56 = arith.truncf %55 : vector<32x128xf32> to vector<32x128xbf16>
    %c0_23 = arith.constant 0 : index
    %c0_24 = arith.constant 0 : index
    %57 = vector.load %arg2[%c0_23, %c0_24] : memref<16x32xbf16, #tpu.memory_space<vmem>>, vector<16x32xbf16>
    %cst_25 = arith.constant dense<0.000000e+00> : vector<16x128xf32>
    %58 = tpu.matmul %57, %56, %cst_25 {dimension_numbers = #tpu.dot_dimension_numbers<[1], [0], [0], [1], [0, 0, 1, 1], [], []>} : vector<16x32xbf16>, vector<32x128xbf16>, vector<16x128xf32> -> vector<16x128xf32>
    %cst_26 = arith.constant dense<0.000000e+00> : vector<128xf32>
    %59 = vector.multi_reduction <add>, %58, %cst_26 [0] : vector<16x128xf32> to vector<128xf32>
    %60 = vector.shape_cast %59 : vector<128xf32> to vector<1x128xf32>
    %61 = arith.mulf %58, %58 : vector<16x128xf32>
    %cst_27 = arith.constant dense<0.000000e+00> : vector<128xf32>
    %62 = vector.multi_reduction <add>, %61, %cst_27 [0] : vector<16x128xf32> to vector<128xf32>
    %63 = vector.shape_cast %62 : vector<128xf32> to vector<1x128xf32>
    %64 = tpu.concatenate %60, %63 in 0 : vector<1x128xf32>, vector<1x128xf32> -> vector<2x128xf32>
    %c1 = arith.constant 1 : index
    %c0_28 = arith.constant 0 : index
    %c0_29 = arith.constant 0 : index
    %65 = vector.load %arg8[%c1, %c0_28, %c0_29] : memref<3x128x32xf32, #tpu.memory_space<vmem>>, vector<1x128x32xf32>
    %66 = vector.shape_cast %65 : vector<1x128x32xf32> to vector<128x32xf32>
    %cst_30 = arith.constant dense<0.000000e+00> : vector<2x32xf32>
    %67 = tpu.matmul %64, %66, %cst_30 {dimension_numbers = #tpu.dot_dimension_numbers<[1], [0], [0], [1], [0, 0, 1, 1], [], []>} : vector<2x128xf32>, vector<128x32xf32>, vector<2x32xf32> -> vector<2x32xf32>
    %68 = vector.extract_strided_slice %67 {offsets = [0, 0], sizes = [1, 32], strides = [1, 1]} : vector<2x32xf32> to vector<1x32xf32>
    %cst_31 = arith.constant 7.812500e-03 : f32
    %69 = vector.broadcast %cst_31 : f32 to vector<1x32xf32>
    %70 = arith.mulf %68, %69 : vector<1x32xf32>
    %71 = vector.extract_strided_slice %67 {offsets = [1, 0], sizes = [1, 32], strides = [1, 1]} : vector<2x32xf32> to vector<1x32xf32>
    %cst_32 = arith.constant 7.812500e-03 : f32
    %72 = vector.broadcast %cst_32 : f32 to vector<1x32xf32>
    %73 = arith.mulf %71, %72 : vector<1x32xf32>
    %74 = arith.mulf %70, %70 : vector<1x32xf32>
    %75 = arith.subf %73, %74 : vector<1x32xf32>
    %c1_33 = arith.constant 1 : index
    %c0_34 = arith.constant 0 : index
    %c0_35 = arith.constant 0 : index
    %76 = vector.load %arg10[%c1_33, %c0_34, %c0_35] : memref<3x2x32xf32, #tpu.memory_space<vmem>>, vector<1x2x32xf32>
    %77 = vector.shape_cast %76 : vector<1x2x32xf32> to vector<2x32xf32>
    %78 = vector.extract_strided_slice %77 {offsets = [0, 0], sizes = [1, 32], strides = [1, 1]} : vector<2x32xf32> to vector<1x32xf32>
    %cst_36 = arith.constant 9.99999974E-6 : f32
    %79 = vector.broadcast %cst_36 : f32 to vector<1x32xf32>
    %80 = arith.addf %75, %79 : vector<1x32xf32>
    %81 = math.rsqrt %80 : vector<1x32xf32>
    %82 = arith.mulf %78, %81 : vector<1x32xf32>
    %83 = vector.extract_strided_slice %77 {offsets = [1, 0], sizes = [1, 32], strides = [1, 1]} : vector<2x32xf32> to vector<1x32xf32>
    %84 = arith.mulf %70, %82 : vector<1x32xf32>
    %85 = arith.subf %83, %84 : vector<1x32xf32>
    %86 = tpu.concatenate %82, %85 in 0 : vector<1x32xf32>, vector<1x32xf32> -> vector<2x32xf32>
    %c1_37 = arith.constant 1 : index
    %c0_38 = arith.constant 0 : index
    %c0_39 = arith.constant 0 : index
    %87 = vector.load %arg9[%c1_37, %c0_38, %c0_39] : memref<3x32x128xf32, #tpu.memory_space<vmem>>, vector<1x32x128xf32>
    %88 = vector.shape_cast %87 : vector<1x32x128xf32> to vector<32x128xf32>
    %cst_40 = arith.constant dense<0.000000e+00> : vector<2x128xf32>
    %89 = tpu.matmul %86, %88, %cst_40 {dimension_numbers = #tpu.dot_dimension_numbers<[1], [0], [0], [1], [0, 0, 1, 1], [], []>} : vector<2x32xf32>, vector<32x128xf32>, vector<2x128xf32> -> vector<2x128xf32>
    %90 = vector.extract_strided_slice %89 {offsets = [0, 0], sizes = [1, 128], strides = [1, 1]} : vector<2x128xf32> to vector<1x128xf32>
    %91 = vector.broadcast %90 : vector<1x128xf32> to vector<16x128xf32>
    %92 = arith.mulf %58, %91 : vector<16x128xf32>
    %93 = vector.extract_strided_slice %89 {offsets = [1, 0], sizes = [1, 128], strides = [1, 1]} : vector<2x128xf32> to vector<1x128xf32>
    %94 = vector.broadcast %93 : vector<1x128xf32> to vector<16x128xf32>
    %95 = arith.addf %92, %94 : vector<16x128xf32>
    %cst_41 = arith.constant 0.000000e+00 : f32
    %96 = vector.broadcast %cst_41 : f32 to vector<16x128xf32>
    %97 = arith.maximumf %95, %96 : vector<16x128xf32>
    %98 = arith.truncf %97 : vector<16x128xf32> to vector<16x128xbf16>
    %c0_42 = arith.constant 0 : index
    %c0_43 = arith.constant 0 : index
    %99 = vector.load %arg5[%c0_42, %c0_43] : memref<128x512xbf16, #tpu.memory_space<vmem>>, vector<128x512xbf16>
    %cst_44 = arith.constant dense<0.000000e+00> : vector<16x512xf32>
    %100 = tpu.matmul %98, %99, %cst_44 {dimension_numbers = #tpu.dot_dimension_numbers<[1], [0], [0], [1], [0, 0, 1, 1], [], []>} : vector<16x128xbf16>, vector<128x512xbf16>, vector<16x512xf32> -> vector<16x512xf32>
    %101 = vector.extract_strided_slice %100 {offsets = [0, 0], sizes = [16, 128], strides = [1, 1]} : vector<16x512xf32> to vector<16x128xf32>
    %102 = vector.extract_strided_slice %100 {offsets = [0, 128], sizes = [16, 128], strides = [1, 1]} : vector<16x512xf32> to vector<16x128xf32>
    %103 = vector.extract_strided_slice %100 {offsets = [0, 256], sizes = [16, 128], strides = [1, 1]} : vector<16x512xf32> to vector<16x128xf32>
    %104 = vector.extract_strided_slice %100 {offsets = [0, 384], sizes = [16, 128], strides = [1, 1]} : vector<16x512xf32> to vector<16x128xf32>
    %105 = tpu.concatenate %101, %102, %103, %104 in 0 : vector<16x128xf32>, vector<16x128xf32>, vector<16x128xf32>, vector<16x128xf32> -> vector<64x128xf32>
    %106 = arith.truncf %105 : vector<64x128xf32> to vector<64x128xbf16>
    %c0_45 = arith.constant 0 : index
    %c0_46 = arith.constant 0 : index
    %107 = vector.load %arg4[%c0_45, %c0_46] : memref<32x64xbf16, #tpu.memory_space<vmem>>, vector<32x64xbf16>
    %cst_47 = arith.constant dense<0.000000e+00> : vector<32x128xf32>
    %108 = tpu.matmul %107, %106, %cst_47 {dimension_numbers = #tpu.dot_dimension_numbers<[1], [0], [0], [1], [0, 0, 1, 1], [], []>} : vector<32x64xbf16>, vector<64x128xbf16>, vector<32x128xf32> -> vector<32x128xf32>
    %cst_48 = arith.constant dense<0.000000e+00> : vector<128xf32>
    %109 = vector.multi_reduction <add>, %108, %cst_48 [0] : vector<32x128xf32> to vector<128xf32>
    %110 = vector.shape_cast %109 : vector<128xf32> to vector<1x128xf32>
    %111 = arith.mulf %108, %108 : vector<32x128xf32>
    %cst_49 = arith.constant dense<0.000000e+00> : vector<128xf32>
    %112 = vector.multi_reduction <add>, %111, %cst_49 [0] : vector<32x128xf32> to vector<128xf32>
    %113 = vector.shape_cast %112 : vector<128xf32> to vector<1x128xf32>
    %114 = tpu.concatenate %110, %113 in 0 : vector<1x128xf32>, vector<1x128xf32> -> vector<2x128xf32>
    %c2 = arith.constant 2 : index
    %c0_50 = arith.constant 0 : index
    %c0_51 = arith.constant 0 : index
    %115 = vector.load %arg8[%c2, %c0_50, %c0_51] : memref<3x128x32xf32, #tpu.memory_space<vmem>>, vector<1x128x32xf32>
    %116 = vector.shape_cast %115 : vector<1x128x32xf32> to vector<128x32xf32>
    %cst_52 = arith.constant dense<0.000000e+00> : vector<2x32xf32>
    %117 = tpu.matmul %114, %116, %cst_52 {dimension_numbers = #tpu.dot_dimension_numbers<[1], [0], [0], [1], [0, 0, 1, 1], [], []>} : vector<2x128xf32>, vector<128x32xf32>, vector<2x32xf32> -> vector<2x32xf32>
    %118 = vector.extract_strided_slice %117 {offsets = [0, 0], sizes = [1, 32], strides = [1, 1]} : vector<2x32xf32> to vector<1x32xf32>
    %cst_53 = arith.constant 0.001953125 : f32
    %119 = vector.broadcast %cst_53 : f32 to vector<1x32xf32>
    %120 = arith.mulf %118, %119 : vector<1x32xf32>
    %121 = vector.extract_strided_slice %117 {offsets = [1, 0], sizes = [1, 32], strides = [1, 1]} : vector<2x32xf32> to vector<1x32xf32>
    %cst_54 = arith.constant 0.001953125 : f32
    %122 = vector.broadcast %cst_54 : f32 to vector<1x32xf32>
    %123 = arith.mulf %121, %122 : vector<1x32xf32>
    %124 = arith.mulf %120, %120 : vector<1x32xf32>
    %125 = arith.subf %123, %124 : vector<1x32xf32>
    %c2_55 = arith.constant 2 : index
    %c0_56 = arith.constant 0 : index
    %c0_57 = arith.constant 0 : index
    %126 = vector.load %arg10[%c2_55, %c0_56, %c0_57] : memref<3x2x32xf32, #tpu.memory_space<vmem>>, vector<1x2x32xf32>
    %127 = vector.shape_cast %126 : vector<1x2x32xf32> to vector<2x32xf32>
    %128 = vector.extract_strided_slice %127 {offsets = [0, 0], sizes = [1, 32], strides = [1, 1]} : vector<2x32xf32> to vector<1x32xf32>
    %cst_58 = arith.constant 9.99999974E-6 : f32
    %129 = vector.broadcast %cst_58 : f32 to vector<1x32xf32>
    %130 = arith.addf %125, %129 : vector<1x32xf32>
    %131 = math.rsqrt %130 : vector<1x32xf32>
    %132 = arith.mulf %128, %131 : vector<1x32xf32>
    %133 = vector.extract_strided_slice %127 {offsets = [1, 0], sizes = [1, 32], strides = [1, 1]} : vector<2x32xf32> to vector<1x32xf32>
    %134 = arith.mulf %120, %132 : vector<1x32xf32>
    %135 = arith.subf %133, %134 : vector<1x32xf32>
    %136 = tpu.concatenate %132, %135 in 0 : vector<1x32xf32>, vector<1x32xf32> -> vector<2x32xf32>
    %c2_59 = arith.constant 2 : index
    %c0_60 = arith.constant 0 : index
    %c0_61 = arith.constant 0 : index
    %137 = vector.load %arg9[%c2_59, %c0_60, %c0_61] : memref<3x32x128xf32, #tpu.memory_space<vmem>>, vector<1x32x128xf32>
    %138 = vector.shape_cast %137 : vector<1x32x128xf32> to vector<32x128xf32>
    %cst_62 = arith.constant dense<0.000000e+00> : vector<2x128xf32>
    %139 = tpu.matmul %136, %138, %cst_62 {dimension_numbers = #tpu.dot_dimension_numbers<[1], [0], [0], [1], [0, 0, 1, 1], [], []>} : vector<2x32xf32>, vector<32x128xf32>, vector<2x128xf32> -> vector<2x128xf32>
    %140 = vector.extract_strided_slice %139 {offsets = [0, 0], sizes = [1, 128], strides = [1, 1]} : vector<2x128xf32> to vector<1x128xf32>
    %141 = vector.broadcast %140 : vector<1x128xf32> to vector<32x128xf32>
    %142 = arith.mulf %108, %141 : vector<32x128xf32>
    %143 = vector.extract_strided_slice %139 {offsets = [1, 0], sizes = [1, 128], strides = [1, 1]} : vector<2x128xf32> to vector<1x128xf32>
    %144 = vector.broadcast %143 : vector<1x128xf32> to vector<32x128xf32>
    %145 = arith.addf %142, %144 : vector<32x128xf32>
    %cst_63 = arith.constant 0.000000e+00 : f32
    %146 = vector.broadcast %cst_63 : f32 to vector<32x128xf32>
    %147 = arith.maximumf %145, %146 : vector<32x128xf32>
    %148 = arith.truncf %147 : vector<32x128xf32> to vector<32x128xbf16>
    %c0_64 = arith.constant 0 : index
    %c0_65 = arith.constant 0 : index
    %149 = vector.load %arg7[%c0_64, %c0_65] : memref<128x256xbf16, #tpu.memory_space<vmem>>, vector<128x256xbf16>
    %cst_66 = arith.constant dense<0.000000e+00> : vector<32x256xf32>
    %150 = tpu.matmul %148, %149, %cst_66 {dimension_numbers = #tpu.dot_dimension_numbers<[1], [0], [0], [1], [0, 0, 1, 1], [], []>} : vector<32x128xbf16>, vector<128x256xbf16>, vector<32x256xf32> -> vector<32x256xf32>
    %151 = vector.extract_strided_slice %150 {offsets = [0, 0], sizes = [32, 128], strides = [1, 1]} : vector<32x256xf32> to vector<32x128xf32>
    %152 = vector.extract_strided_slice %150 {offsets = [0, 128], sizes = [32, 128], strides = [1, 1]} : vector<32x256xf32> to vector<32x128xf32>
    %153 = tpu.concatenate %151, %152 in 0 : vector<32x128xf32>, vector<32x128xf32> -> vector<64x128xf32>
    %154 = arith.truncf %153 : vector<64x128xf32> to vector<64x128xbf16>
    %c0_67 = arith.constant 0 : index
    %c0_68 = arith.constant 0 : index
    %155 = vector.load %arg6[%c0_67, %c0_68] : memref<56x64xbf16, #tpu.memory_space<vmem>>, vector<56x64xbf16>
    %cst_69 = arith.constant dense<0.000000e+00> : vector<56x128xf32>
    %156 = tpu.matmul %155, %154, %cst_69 {dimension_numbers = #tpu.dot_dimension_numbers<[1], [0], [0], [1], [0, 0, 1, 1], [], []>} : vector<56x64xbf16>, vector<64x128xbf16>, vector<56x128xf32> -> vector<56x128xf32>
    %157 = math.tanh %156 : vector<56x128xf32>
    %c0_70 = arith.constant 0 : index
    %c0_71 = arith.constant 0 : index
    %158 = vector.load %arg11[%c0_70, %c0_71] : memref<56x128xf32, #tpu.memory_space<vmem>>, vector<56x128xf32>
    tpu.vector_store %arg11[%c0_70, %c0_71], %157 {strides = array<i32>} : memref<56x128xf32, #tpu.memory_space<vmem>>, vector<56x128xf32>,
    return
  }
}

</mosaic_0001>

<llo_original>
// kernel: _generator_apply.1
$region0: #{_generator_apply.1}
  #allocation0 [shape = 'u32[]', space=smem, size = 0x4, offset = 0x4, fixed_abs, tag = 'smem constant byte address 0x4 - core index']
  #allocation1 [shape = 'u32[144,128]{1,0:T(1,128)}', space=vmem, size = 0x12000, scoped, tag = 'internal scratch']
  %s0 = inlined_call_operand.vmem [shape: f32[2,16], index: 0, kind: input, shape index: {}]
  %s1 = inlined_call_operand.hbm [shape: bf16[16,512], index: 1, kind: input, shape index: {}]
  %s2 = inlined_call_operand.vmem [shape: bf16[16,32], index: 2, kind: input, shape index: {}]
  %s3 = inlined_call_operand.vmem [shape: bf16[128,512], index: 3, kind: input, shape index: {}]
  %s4 = inlined_call_operand.hbm [shape: bf16[32,64], index: 4, kind: input, shape index: {}]
  %s5 = inlined_call_operand.hbm [shape: bf16[128,512], index: 5, kind: input, shape index: {}]
  %s6 = inlined_call_operand.hbm [shape: bf16[56,64], index: 6, kind: input, shape index: {}]
  %s7 = inlined_call_operand.vmem [shape: bf16[128,256], index: 7, kind: input, shape index: {}]
  %s8 = inlined_call_operand.vmem [shape: f32[3,128,32], index: 8, kind: input, shape index: {}]
  %s9 = inlined_call_operand.vmem [shape: f32[3,32,128], index: 9, kind: input, shape index: {}]
  %s10 = inlined_call_operand.vmem [shape: f32[3,2,32], index: 10, kind: input, shape index: {}]
  %s11 = inlined_call_operand.vmem [shape: f32[56,128], index: 11, kind: output, shape index: {}]
  %s12 = sld [smem:[#allocation0]]
  $region70: #{_generator_apply.1} parent=0
    _
  %s14 = ssub.s32 1, %s12
  %s15 = scalar_select 0, %s14, %s12
  $region1: #{_generator_apply.1} parent=0
    #allocation2 [shape = 'u8[16384]{0}', space=vmem, size = 0x4000, scoped, tag = 'input window, operand 1, single buffered']
    #allocation3 [shape = 's32[1]{0}', space=sflag, size = 0x4, scoped, tag = 'scoped memory for _generator_apply.1']
    #allocation4 [shape = 'u8[8192]{0}', space=vmem, size = 0x2000, scoped, tag = 'input window, operand 4, single buffered']
    #allocation5 [shape = 's32[1]{0}', space=sflag, size = 0x4, scoped, tag = 'scoped memory for _generator_apply.1']
    #allocation6 [shape = 'u8[131072]{0}', space=vmem, size = 0x20000, scoped, tag = 'input window, operand 5, single buffered']
    #allocation7 [shape = 'u8[14336]{0}', space=vmem, size = 0x3800, scoped, tag = 'input window, operand 6, single buffered']
    #allocation8 [shape = 's32[1]{0}', space=sflag, size = 0x4, scoped, tag = 'scoped memory for _generator_apply.1']
    %16 = vsyncpa [#allocation3], 0
    %17 = vsyncpa [#allocation5], 0
    %18 = vsyncpa [#allocation8], 0
    // Predicated region
    $region2: #{_generator_apply.1} parent=1 // pred_check
      _
    $region3: #{_generator_apply.1} parent=1 // pred_check_branch
      %20 = sbr.rel (0) target = $region5
    $region4: #{_generator_apply.1} parent=1 // pred_region
      _
    $region5: #{_generator_apply.1} parent=1 // pred_fallthru
      _
    // Predicated region
    $region6: #{_generator_apply.1} parent=1 // pred_check
      _
    $region7: #{_generator_apply.1} parent=1 // pred_check_branch
      %22 = sbr.rel (0) target = $region9
    $region8: #{_generator_apply.1} parent=1 // pred_region
      %s24 = ssub.s32 512, 512
      %25 = vsyncadd [#allocation3], %s24
      %s26 = sshll.u32 [#allocation2], 4
      %s27 = int_to_ptr.vmem [resolvable:$true] %s26
      %32 = dma.hbm_to_vmem [thread:$0]  %s1, 512, %s27, [#allocation3], 256, 256, 16
    $region9: #{_generator_apply.1} parent=1 // pred_fallthru
      _
    // Predicated region
    $region10: #{_generator_apply.1} parent=1 // pred_check
      _
    $region11: #{_generator_apply.1} parent=1 // pred_check_branch
      %34 = sbr.rel (0) target = $region13
    $region12: #{_generator_apply.1} parent=1 // pred_region
      _
    $region13: #{_generator_apply.1} parent=1 // pred_fallthru
      _
    // Predicated region
    $region14: #{_generator_apply.1} parent=1 // pred_check
      _
    $region15: #{_generator_apply.1} parent=1 // pred_check_branch
      %36 = sbr.rel (0) target = $region17
    $region16: #{_generator_apply.1} parent=1 // pred_region
      _
    $region17: #{_generator_apply.1} parent=1 // pred_fallthru
      _
    // Predicated region
    $region18: #{_generator_apply.1} parent=1 // pred_check
      _
    $region19: #{_generator_apply.1} parent=1 // pred_check_branch
      %38 = sbr.rel (0) target = $region21
    $region20: #{_generator_apply.1} parent=1 // pred_region
      %s40 = ssub.s32 256, 256
      %41 = vsyncadd [#allocation5], %s40
      %s42 = sshll.u32 [#allocation4], 4
      %s43 = int_to_ptr.vmem [resolvable:$true] %s42
      %48 = dma.hbm_to_vmem [thread:$0]  %s4, 256, %s43, [#allocation5], 64, 64, 4
    $region21: #{_generator_apply.1} parent=1 // pred_fallthru
      _
    // Predicated region
    $region22: #{_generator_apply.1} parent=1 // pred_check
      _
    $region23: #{_generator_apply.1} parent=1 // pred_check_branch
      %50 = sbr.rel (0) target = $region25
    $region24: #{_generator_apply.1} parent=1 // pred_region
      %s52 = ssub.s32 4096, 4096
      %53 = vsyncadd [#allocation5], %s52
      %s54 = sshll.u32 [#allocation6], 4
      %s55 = int_to_ptr.vmem [resolvable:$true] %s54
      %60 = dma.hbm_to_vmem [thread:$0]  %s5, 4096, %s55, [#allocation5], 256, 256, 16
    $region25: #{_generator_apply.1} parent=1 // pred_fallthru
      _
    // Predicated region
    $region26: #{_generator_apply.1} parent=1 // pred_check
      _
    $region27: #{_generator_apply.1} parent=1 // pred_check_branch
      %62 = sbr.rel (0) target = $region29
    $region28: #{_generator_apply.1} parent=1 // pred_region
      %s64 = ssub.s32 448, 448
      %65 = vsyncadd [#allocation8], %s64
      %s66 = sshll.u32 [#allocation7], 4
      %s67 = int_to_ptr.vmem [resolvable:$true] %s66
      %72 = dma.hbm_to_vmem [thread:$0]  %s6, 448, %s67, [#allocation8], 64, 64, 4
    $region29: #{_generator_apply.1} parent=1 // pred_fallthru
      _
    // Predicated region
    $region30: #{_generator_apply.1} parent=1 // pred_check
      _
    $region31: #{_generator_apply.1} parent=1 // pred_check_branch
      %74 = sbr.rel (0) target = $region33
    $region32: #{_generator_apply.1} parent=1 // pred_region
      _
    $region33: #{_generator_apply.1} parent=1 // pred_fallthru
      _
    // Predicated region
    $region34: #{_generator_apply.1} parent=1 // pred_check
      _
    $region35: #{_generator_apply.1} parent=1 // pred_check_branch
      %76 = sbr.rel (0) target = $region37
    $region36: #{_generator_apply.1} parent=1 // pred_region
      _
    $region37: #{_generator_apply.1} parent=1 // pred_fallthru
      _
    // Predicated region
    $region38: #{_generator_apply.1} parent=1 // pred_check
      _
    $region39: #{_generator_apply.1} parent=1 // pred_check_branch
      %78 = sbr.rel (0) target = $region41
    $region40: #{_generator_apply.1} parent=1 // pred_region
      _
    $region41: #{_generator_apply.1} parent=1 // pred_fallthru
      _
    // Predicated region
    $region42: #{_generator_apply.1} parent=1 // pred_check
      _
    $region43: #{_generator_apply.1} parent=1 // pred_check_branch
      %80 = sbr.rel (0) target = $region45
    $region44: #{_generator_apply.1} parent=1 // pred_region
      _
    $region45: #{_generator_apply.1} parent=1 // pred_fallthru
      _
    // Predicated region
    $region46: #{_generator_apply.1} parent=1 // pred_check
      _
    $region47: #{_generator_apply.1} parent=1 // pred_check_branch
      %82 = sbr.rel (0) target = $region49
    $region48: #{_generator_apply.1} parent=1 // pred_region
      %83 = dma.done [#allocation3], 512
    $region49: #{_generator_apply.1} parent=1 // pred_fallthru
      _
    // Predicated region
    $region50: #{_generator_apply.1} parent=1 // pred_check
      _
    $region51: #{_generator_apply.1} parent=1 // pred_check_branch
      %85 = sbr.rel (0) target = $region53
    $region52: #{_generator_apply.1} parent=1 // pred_region
      %86 = dma.done [#allocation5], 256
    $region53: #{_generator_apply.1} parent=1 // pred_fallthru
      _
    // Predicated region
    $region54: #{_generator_apply.1} parent=1 // pred_check
      _
    $region55: #{_generator_apply.1} parent=1 // pred_check_branch
      %88 = sbr.rel (0) target = $region57
    $region56: #{_generator_apply.1} parent=1 // pred_region
      %89 = dma.done [#allocation5], 4096
    $region57: #{_generator_apply.1} parent=1 // pred_fallthru
      _
    // Predicated region
    $region58: #{_generator_apply.1} parent=1 // pred_check
      _
    $region59: #{_generator_apply.1} parent=1 // pred_check_branch
      %91 = sbr.rel (0) target = $region61
    $region60: #{_generator_apply.1} parent=1 // pred_region
      %92 = dma.done [#allocation8], 448
    $region61: #{_generator_apply.1} parent=1 // pred_fallthru
      _
    %v94 = vld [vmem:[%s0] sm:$0x3]
    %v95 = vpack.c.bf16 %v94, %v94
    %v96 = vld [vmem:[#allocation2] sm:$0xff]
    %v97 = vld [vmem:[#allocation2 + $0x8] sm:$0xff]
    %v98 = vld [vmem:[#allocation2 + $0x10] sm:$0xff]
    %v99 = vld [vmem:[#allocation2 + $0x18] sm:$0xff]
    %v104 = vunpack.c.l.b16 %v96
    %v105 = vunpack.c.h.b16 %v96
    %v106 = vunpack.c.l.b16 %v97
    %v107 = vunpack.c.h.b16 %v97
    %v108 = vunpack.c.l.b16 %v98
    %v109 = vunpack.c.h.b16 %v98
    %v110 = vunpack.c.l.b16 %v99
    %v111 = vunpack.c.h.b16 %v99
    %v112 = vpack.c.b16 %v108, %v104
    %v113 = vpack.c.b16 %v109, %v105
    %v114 = vpack.c.b16 %v110, %v106
    %v115 = vpack.c.b16 %v111, %v107
    %vm120 = vcmask 130048
    %v122 = vsel %vm120, %v95, 0
    %124 = vmatprep.subr.bf16.mxu0 %v113
    %125 = vmatpush1.bf16.msra.mxu0 %v112
    %126 = vmatprep.subr.bf16.mxu0 0
    %127 = vmatpush1.bf16.msra.mxu0 0
    %128 = vmatprep.subr.bf16.mxu0 0
    %129 = vmatpush1.bf16.msra.mxu0 0
    %130 = vmatprep.subr.bf16.mxu0 0
    %131 = vmatpush1.bf16.msra.mxu0 0
    %132 = vmatprep.subr.bf16.mxu0 0
    %133 = vmatpush1.bf16.msra.mxu0 0
    %134 = vmatprep.subr.bf16.mxu0 0
    %135 = vmatpush1.bf16.msra.mxu0 0
    %136 = vmatprep.subr.bf16.mxu0 0
    %137 = vmatpush1.bf16.msra.mxu0 0
    %138 = vmatprep.subr.bf16.mxu0 0
    %139 = vmatpush1.bf16.msra.mxu0 0
    %140 = vmatprep.subr.bf16.mxu0 0
    %141 = vmatpush1.bf16.msra.mxu0 0
    %142 = vmatprep.subr.bf16.mxu0 0
    %143 = vmatpush1.bf16.msra.mxu0 0
    %144 = vmatprep.subr.bf16.mxu0 0
    %145 = vmatpush1.bf16.msra.mxu0 0
    %146 = vmatprep.subr.bf16.mxu0 0
    %147 = vmatpush1.bf16.msra.mxu0 0
    %148 = vmatprep.subr.bf16.mxu0 0
    %149 = vmatpush1.bf16.msra.mxu0 0
    %150 = vmatprep.subr.bf16.mxu0 0
    %151 = vmatpush1.bf16.msra.mxu0 0
    %152 = vmatprep.subr.bf16.mxu0 0
    %153 = vmatpush1.bf16.msra.mxu0 0
    %154 = vmatprep.subr.bf16.mxu0 0
    %155 = vmatpush1.bf16.msra.mxu0 0
    %156 = vmatprep.mubr.bf16.mxu0 0
    %157 = vmatmul.mubr.bf16.gmra.mrb[0].mxu0 %v122
    %v158 = vpop.f32.mrb[0].mxu0
    %v159 = vadd.f32 0.0, %v158
    %v160 = vpop.f32.mrb[0].mxu0
    %v161 = vadd.f32 0.0, %v160
    %v162 = vpop.f32.mrb[0].mxu0
    %v163 = vpop.f32.mrb[0].mxu0
    %164 = vdwg.mxu0
    %165 = vmatprep.subr.bf16.mxu0 %v115
    %166 = vmatpush1.bf16.msra.mxu0 %v114
    %167 = vmatprep.subr.bf16.mxu0 0
    %168 = vmatpush1.bf16.msra.mxu0 0
    %169 = vmatprep.subr.bf16.mxu0 0
    %170 = vmatpush1.bf16.msra.mxu0 0
    %171 = vmatprep.subr.bf16.mxu0 0
    %172 = vmatpush1.bf16.msra.mxu0 0
    %173 = vmatprep.subr.bf16.mxu0 0
    %174 = vmatpush1.bf16.msra.mxu0 0
    %175 = vmatprep.subr.bf16.mxu0 0
    %176 = vmatpush1.bf16.msra.mxu0 0
    %177 = vmatprep.subr.bf16.mxu0 0
    %178 = vmatpush1.bf16.msra.mxu0 0
    %179 = vmatprep.subr.bf16.mxu0 0
    %180 = vmatpush1.bf16.msra.mxu0 0
    %181 = vmatprep.subr.bf16.mxu0 0
    %182 = vmatpush1.bf16.msra.mxu0 0
    %183 = vmatprep.subr.bf16.mxu0 0
    %184 = vmatpush1.bf16.msra.mxu0 0
    %185 = vmatprep.subr.bf16.mxu0 0
    %186 = vmatpush1.bf16.msra.mxu0 0
    %187 = vmatprep.subr.bf16.mxu0 0
    %188 = vmatpush1.bf16.msra.mxu0 0
    %189 = vmatprep.subr.bf16.mxu0 0
    %190 = vmatpush1.bf16.msra.mxu0 0
    %191 = vmatprep.subr.bf16.mxu0 0
    %192 = vmatpush1.bf16.msra.mxu0 0
    %193 = vmatprep.subr.bf16.mxu0 0
    %194 = vmatpush1.bf16.msra.mxu0 0
    %195 = vmatprep.subr.bf16.mxu0 0
    %196 = vmatpush1.bf16.msra.mxu0 0
    %197 = vmatprep.mubr.bf16.mxu0 0
    %198 = vmatmul.mubr.bf16.gmra.mrb[0].mxu0 %v122
    %v199 = vpop.f32.mrb[0].mxu0
    %v200 = vadd.f32 0.0, %v199
    %v201 = vpop.f32.mrb[0].mxu0
    %v202 = vadd.f32 0.0, %v201
    %v203 = vpop.f32.mrb[0].mxu0
    %v204 = vpop.f32.mrb[0].mxu0
    %205 = vdwg.mxu0
    %v207 = vrot.slane %v161, 6
    %v210 = vrot.slane %v200, 4
    %v213 = vrot.slane %v202, 2
    %vm215 = vcmask 1041408
    %v216 = vsel %vm215, %v159, %v207
    %vm217 = vcmask 1043456
    %v218 = vsel %vm217, %v216, %v210
    %vm219 = vcmask 1045504
    %v220 = vsel %vm219, %v218, %v213
    %v221 = vrot.slane %v220, 4
    %v222 = vadd.f32 %v220, %v221
    %v223 = vrot.slane %v222, 2
    %v224 = vadd.f32 %v222, %v223
    %v225 = vrot.slane %v224, 1
    %v226 = vadd.f32 %v224, %v225
    %v227 = vmul.f32 %v220, %v220
    %v228 = vrot.slane %v227, 4
    %v229 = vadd.f32 %v227, %v228
    %v230 = vrot.slane %v229, 2
    %v231 = vadd.f32 %v229, %v230
    %v232 = vrot.slane %v231, 1
    %v233 = vadd.f32 %v231, %v232
    %vm234 = vcmask 1040384
    %v235 = vsel %vm234, %v226, %v233
    %v236 = vld [vmem:[%s8] sm:$0xff]
    %v237 = vld [vmem:[%s8 + $0x8] sm:$0xff]
    %v238 = vld [vmem:[%s8 + $0x10] sm:$0xff]
    %v239 = vld [vmem:[%s8 + $0x18] sm:$0xff]
    %v240 = vld [vmem:[%s8 + $0x20] sm:$0xff]
    %v241 = vld [vmem:[%s8 + $0x28] sm:$0xff]
    %v242 = vld [vmem:[%s8 + $0x30] sm:$0xff]
    %v243 = vld [vmem:[%s8 + $0x38] sm:$0xff]
    %v244 = vld [vmem:[%s8 + $0x40] sm:$0xff]
    %v245 = vld [vmem:[%s8 + $0x48] sm:$0xff]
    %v246 = vld [vmem:[%s8 + $0x50] sm:$0xff]
    %v247 = vld [vmem:[%s8 + $0x58] sm:$0xff]
    %v248 = vld [vmem:[%s8 + $0x60] sm:$0xff]
    %v249 = vld [vmem:[%s8 + $0x68] sm:$0xff]
    %v250 = vld [vmem:[%s8 + $0x70] sm:$0xff]
    %v251 = vld [vmem:[%s8 + $0x78] sm:$0xff]
    %252 = vmatprep.subr.mxu0 0.0
    %253 = vmatpush1.msra.mxu0 %v236
    %254 = vmatprep.subr.mxu0 0.0
    %255 = vmatpush1.msra.mxu0 %v237
    %256 = vmatprep.subr.mxu0 0.0
    %257 = vmatpush1.msra.mxu0 %v238
    %258 = vmatprep.subr.mxu0 0.0
    %259 = vmatpush1.msra.mxu0 %v239
    %260 = vmatprep.subr.mxu0 0.0
    %261 = vmatpush1.msra.mxu0 %v240
    %262 = vmatprep.subr.mxu0 0.0
    %263 = vmatpush1.msra.mxu0 %v241
    %264 = vmatprep.subr.mxu0 0.0
    %265 = vmatpush1.msra.mxu0 %v242
    %266 = vmatprep.subr.mxu0 0.0
    %267 = vmatpush1.msra.mxu0 %v243
    %268 = vmatprep.subr.mxu0 0.0
    %269 = vmatpush1.msra.mxu0 %v244
    %270 = vmatprep.subr.mxu0 0.0
    %271 = vmatpush1.msra.mxu0 %v245
    %272 = vmatprep.subr.mxu0 0.0
    %273 = vmatpush1.msra.mxu0 %v246
    %274 = vmatprep.subr.mxu0 0.0
    %275 = vmatpush1.msra.mxu0 %v247
    %276 = vmatprep.subr.mxu0 0.0
    %277 = vmatpush1.msra.mxu0 %v248
    %278 = vmatprep.subr.mxu0 0.0
    %279 = vmatpush1.msra.mxu0 %v249
    %280 = vmatprep.subr.mxu0 0.0
    %281 = vmatpush1.msra.mxu0 %v250
    %282 = vmatprep.subr.mxu0 0.0
    %283 = vmatpush1.msra.mxu0 %v251
    %284 = vmatprep.subr.mxu0 0.0
    %285 = vmatpush1.msra.mxu0 0.0
    %286 = vmatprep.subr.mxu0 0.0
    %287 = vmatpush1.msra.mxu0 0.0
    %288 = vmatprep.subr.mxu0 0.0
    %289 = vmatpush1.msra.mxu0 0.0
    %290 = vmatprep.subr.mxu0 0.0
    %291 = vmatpush1.msra.mxu0 0.0
    %292 = vmatprep.subr.mxu0 0.0
    %293 = vmatpush1.msra.mxu0 0.0
    %294 = vmatprep.subr.mxu0 0.0
    %295 = vmatpush1.msra.mxu0 0.0
    %296 = vmatprep.subr.mxu0 0.0
    %297 = vmatpush1.msra.mxu0 0.0
    %298 = vmatprep.subr.mxu0 0.0
    %299 = vmatpush1.msra.mxu0 0.0
    %300 = vmatprep.subr.mxu0 0.0
    %301 = vmatpush1.msra.mxu0 0.0
    %302 = vmatprep.subr.mxu0 0.0
    %303 = vmatpush1.msra.mxu0 0.0
    %304 = vmatprep.subr.mxu0 0.0
    %305 = vmatpush1.msra.mxu0 0.0
    %306 = vmatprep.subr.mxu0 0.0
    %307 = vmatpush1.msra.mxu0 0.0
    %308 = vmatprep.subr.mxu0 0.0
    %309 = vmatpush1.msra.mxu0 0.0
    %310 = vmatprep.subr.mxu0 0.0
    %311 = vmatpush1.msra.mxu0 0.0
    %312 = vmatprep.subr.mxu0 0.0
    %313 = vmatpush1.msra.mxu0 0.0
    %314 = vmatprep.subr.mxu0 0.0
    %315 = vmatpush1.msra.mxu0 0.0
    %316 = vmatprep.mubr.f32.mxu0 0.0
    %317 = vmatmul.mubr.f32.gmra.mrb[0].mxu0 %v235
    %v318 = vpop.f32.mrb[0].mxu0
    %v319 = vadd.f32 0.0, %v318
    %v320 = vpop.f32.mrb[0].mxu0
    %321 = vdwg.mxu0
    %v322 = vmul.f32 %v319, 0.03125
    %v323 = vmul.f32 %v322, %v322
    %v325 = vrot.slane %v323, 7
    %v327 = vsub.f32 %v322, %v325
    %v328 = vld [vmem:[%s10] sm:$0x3]
    %v329 = vadd.f32 %v327, 1e-05
    %v330 = vrsqrt.pop %v329
    %v332 = vrot.slane %v330, 1
    %v334 = vmul.f32 %v328, %v332
    %v335 = vmul.f32 %v322, %v334
    %v337 = vrot.slane %v335, 7
    %v339 = vsub.f32 %v328, %v337
    %v340 = vsel %vm234, %v334, %v339
    %v341 = vld [vmem:[%s9] sm:$0xff]
    %v342 = vld [vmem:[%s9 + $0x8] sm:$0xff]
    %v343 = vld [vmem:[%s9 + $0x10] sm:$0xff]
    %v344 = vld [vmem:[%s9 + $0x18] sm:$0xff]
    %vm345 = vcmask 261120
    %v347 = vsel %vm345, %v340, 0
    %349 = vmatprep.subr.mxu0 0.0
    %350 = vmatpush1.msra.mxu0 %v341
    %351 = vmatprep.subr.mxu0 0.0
    %352 = vmatpush1.msra.mxu0 %v342
    %353 = vmatprep.subr.mxu0 0.0
    %354 = vmatpush1.msra.mxu0 %v343
    %355 = vmatprep.subr.mxu0 0.0
    %356 = vmatpush1.msra.mxu0 %v344
    %357 = vmatprep.subr.mxu0 0.0
    %358 = vmatpush1.msra.mxu0 0.0
    %359 = vmatprep.subr.mxu0 0.0
    %360 = vmatpush1.msra.mxu0 0.0
    %361 = vmatprep.subr.mxu0 0.0
    %362 = vmatpush1.msra.mxu0 0.0
    %363 = vmatprep.subr.mxu0 0.0
    %364 = vmatpush1.msra.mxu0 0.0
    %365 = vmatprep.subr.mxu0 0.0
    %366 = vmatpush1.msra.mxu0 0.0
    %367 = vmatprep.subr.mxu0 0.0
    %368 = vmatpush1.msra.mxu0 0.0
    %369 = vmatprep.subr.mxu0 0.0
    %370 = vmatpush1.msra.mxu0 0.0
    %371 = vmatprep.subr.mxu0 0.0
    %372 = vmatpush1.msra.mxu0 0.0
    %373 = vmatprep.subr.mxu0 0.0
    %374 = vmatpush1.msra.mxu0 0.0
    %375 = vmatprep.subr.mxu0 0.0
    %376 = vmatpush1.msra.mxu0 0.0
    %377 = vmatprep.subr.mxu0 0.0
    %378 = vmatpush1.msra.mxu0 0.0
    %379 = vmatprep.subr.mxu0 0.0
    %380 = vmatpush1.msra.mxu0 0.0
    %381 = vmatprep.subr.mxu0 0.0
    %382 = vmatpush1.msra.mxu0 0.0
    %383 = vmatprep.subr.mxu0 0.0
    %384 = vmatpush1.msra.mxu0 0.0
    %385 = vmatprep.subr.mxu0 0.0
    %386 = vmatpush1.msra.mxu0 0.0
    %387 = vmatprep.subr.mxu0 0.0
    %388 = vmatpush1.msra.mxu0 0.0
    %389 = vmatprep.subr.mxu0 0.0
    %390 = vmatpush1.msra.mxu0 0.0
    %391 = vmatprep.subr.mxu0 0.0
    %392 = vmatpush1.msra.mxu0 0.0
    %393 = vmatprep.subr.mxu0 0.0
    %394 = vmatpush1.msra.mxu0 0.0
    %395 = vmatprep.subr.mxu0 0.0
    %396 = vmatpush1.msra.mxu0 0.0
    %397 = vmatprep.subr.mxu0 0.0
    %398 = vmatpush1.msra.mxu0 0.0
    %399 = vmatprep.subr.mxu0 0.0
    %400 = vmatpush1.msra.mxu0 0.0
    %401 = vmatprep.subr.mxu0 0.0
    %402 = vmatpush1.msra.mxu0 0.0
    %403 = vmatprep.subr.mxu0 0.0
    %404 = vmatpush1.msra.mxu0 0.0
    %405 = vmatprep.subr.mxu0 0.0
    %406 = vmatpush1.msra.mxu0 0.0
    %407 = vmatprep.subr.mxu0 0.0
    %408 = vmatpush1.msra.mxu0 0.0
    %409 = vmatprep.subr.mxu0 0.0
    %410 = vmatpush1.msra.mxu0 0.0
    %411 = vmatprep.subr.mxu0 0.0
    %412 = vmatpush1.msra.mxu0 0.0
    %413 = vmatprep.mubr.f32.mxu0 0.0
    %414 = vmatmul.mubr.f32.gmra.mrb[0].mxu0 %v347
    %v415 = vpop.f32.mrb[0].mxu0
    %v416 = vadd.f32 0.0, %v415
    %v417 = vpop.f32.mrb[0].mxu0
    %418 = vdwg.mxu0
    %v419 = vlaneseq
    %v420 = vshrl.u32 %v419, 7
    %v421 = vsub.s32 0, %v420
    %v422 = vrot.slane %v416, %v421
    %v423 = vmul.f32 %v220, %v422
    %v424 = vlaneseq
    %v425 = vshrl.u32 %v424, 7
    %v426 = vsub.s32 1, %v425
    %v427 = vrot.slane %v416, %v426
    %v428 = vadd.f32 %v423, %v427
    %v429 = vmax.f32 %v428, 0.0
    %v430 = vpack.c.bf16 %v429, %v429
    %v431 = vld [vmem:[%s3] sm:$0xff]
    %v432 = vld [vmem:[%s3 + $0x8] sm:$0xff]
    %v433 = vld [vmem:[%s3 + $0x10] sm:$0xff]
    %v434 = vld [vmem:[%s3 + $0x18] sm:$0xff]
    %v435 = vld [vmem:[%s3 + $0x20] sm:$0xff]
    %v436 = vld [vmem:[%s3 + $0x28] sm:$0xff]
    %v437 = vld [vmem:[%s3 + $0x30] sm:$0xff]
    %v438 = vld [vmem:[%s3 + $0x38] sm:$0xff]
    %v439 = vld [vmem:[%s3 + $0x40] sm:$0xff]
    %v440 = vld [vmem:[%s3 + $0x48] sm:$0xff]
    %v441 = vld [vmem:[%s3 + $0x50] sm:$0xff]
    %v442 = vld [vmem:[%s3 + $0x58] sm:$0xff]
    %v443 = vld [vmem:[%s3 + $0x60] sm:$0xff]
    %v444 = vld [vmem:[%s3 + $0x68] sm:$0xff]
    %v445 = vld [vmem:[%s3 + $0x70] sm:$0xff]
    %v446 = vld [vmem:[%s3 + $0x78] sm:$0xff]
    %v447 = vld [vmem:[%s3 + $0x80] sm:$0xff]
    %v448 = vld [vmem:[%s3 + $0x88] sm:$0xff]
    %v449 = vld [vmem:[%s3 + $0x90] sm:$0xff]
    %v450 = vld [vmem:[%s3 + $0x98] sm:$0xff]
    %v451 = vld [vmem:[%s3 + $0xa0] sm:$0xff]
    %v452 = vld [vmem:[%s3 + $0xa8] sm:$0xff]
    %v453 = vld [vmem:[%s3 + $0xb0] sm:$0xff]
    %v454 = vld [vmem:[%s3 + $0xb8] sm:$0xff]
    %v455 = vld [vmem:[%s3 + $0xc0] sm:$0xff]
    %v456 = vld [vmem:[%s3 + $0xc8] sm:$0xff]
    %v457 = vld [vmem:[%s3 + $0xd0] sm:$0xff]
    %v458 = vld [vmem:[%s3 + $0xd8] sm:$0xff]
    %v459 = vld [vmem:[%s3 + $0xe0] sm:$0xff]
    %v460 = vld [vmem:[%s3 + $0xe8] sm:$0xff]
    %v461 = vld [vmem:[%s3 + $0xf0] sm:$0xff]
    %v462 = vld [vmem:[%s3 + $0xf8] sm:$0xff]
    %v495 = vunpack.c.l.b16 %v431
    %v496 = vunpack.c.h.b16 %v431
    %v497 = vunpack.c.l.b16 %v432
    %v498 = vunpack.c.h.b16 %v432
    %v499 = vunpack.c.l.b16 %v433
    %v500 = vunpack.c.h.b16 %v433
    %v501 = vunpack.c.l.b16 %v434
    %v502 = vunpack.c.h.b16 %v434
    %v503 = vunpack.c.l.b16 %v435
    %v504 = vunpack.c.h.b16 %v435
    %v505 = vunpack.c.l.b16 %v436
    %v506 = vunpack.c.h.b16 %v436
    %v507 = vunpack.c.l.b16 %v437
    %v508 = vunpack.c.h.b16 %v437
    %v509 = vunpack.c.l.b16 %v438
    %v510 = vunpack.c.h.b16 %v438
    %v511 = vunpack.c.l.b16 %v439
    %v512 = vunpack.c.h.b16 %v439
    %v513 = vunpack.c.l.b16 %v440
    %v514 = vunpack.c.h.b16 %v440
    %v515 = vunpack.c.l.b16 %v441
    %v516 = vunpack.c.h.b16 %v441
    %v517 = vunpack.c.l.b16 %v442
    %v518 = vunpack.c.h.b16 %v442
    %v519 = vunpack.c.l.b16 %v443
    %v520 = vunpack.c.h.b16 %v443
    %v521 = vunpack.c.l.b16 %v444
    %v522 = vunpack.c.h.b16 %v444
    %v523 = vunpack.c.l.b16 %v445
    %v524 = vunpack.c.h.b16 %v445
    %v525 = vunpack.c.l.b16 %v446
    %v526 = vunpack.c.h.b16 %v446
    %v527 = vunpack.c.l.b16 %v447
    %v528 = vunpack.c.h.b16 %v447
    %v529 = vunpack.c.l.b16 %v448
    %v530 = vunpack.c.h.b16 %v448
    %v531 = vunpack.c.l.b16 %v449
    %v532 = vunpack.c.h.b16 %v449
    %v533 = vunpack.c.l.b16 %v450
    %v534 = vunpack.c.h.b16 %v450
    %v535 = vunpack.c.l.b16 %v451
    %v536 = vunpack.c.h.b16 %v451
    %v537 = vunpack.c.l.b16 %v452
    %v538 = vunpack.c.h.b16 %v452
    %v539 = vunpack.c.l.b16 %v453
    %v540 = vunpack.c.h.b16 %v453
    %v541 = vunpack.c.l.b16 %v454
    %v542 = vunpack.c.h.b16 %v454
    %v543 = vunpack.c.l.b16 %v455
    %v544 = vunpack.c.h.b16 %v455
    %v545 = vunpack.c.l.b16 %v456
    %v546 = vunpack.c.h.b16 %v456
    %v547 = vunpack.c.l.b16 %v457
    %v548 = vunpack.c.h.b16 %v457
    %v549 = vunpack.c.l.b16 %v458
    %v550 = vunpack.c.h.b16 %v458
    %v551 = vunpack.c.l.b16 %v459
    %v552 = vunpack.c.h.b16 %v459
    %v553 = vunpack.c.l.b16 %v460
    %v554 = vunpack.c.h.b16 %v460
    %v555 = vunpack.c.l.b16 %v461
    %v556 = vunpack.c.h.b16 %v461
    %v557 = vunpack.c.l.b16 %v462
    %v558 = vunpack.c.h.b16 %v462
    %v559 = vpack.c.b16 %v499, %v495
    %v560 = vpack.c.b16 %v500, %v496
    %v561 = vpack.c.b16 %v501, %v497
    %v562 = vpack.c.b16 %v502, %v498
    %v563 = vpack.c.b16 %v507, %v503
    %v564 = vpack.c.b16 %v508, %v504
    %v565 = vpack.c.b16 %v509, %v505
    %v566 = vpack.c.b16 %v510, %v506
    %v567 = vpack.c.b16 %v515, %v511
    %v568 = vpack.c.b16 %v516, %v512
    %v569 = vpack.c.b16 %v517, %v513
    %v570 = vpack.c.b16 %v518, %v514
    %v571 = vpack.c.b16 %v523, %v519
    %v572 = vpack.c.b16 %v524, %v520
    %v573 = vpack.c.b16 %v525, %v521
    %v574 = vpack.c.b16 %v526, %v522
    %v575 = vpack.c.b16 %v531, %v527
    %v576 = vpack.c.b16 %v532, %v528
    %v577 = vpack.c.b16 %v533, %v529
    %v578 = vpack.c.b16 %v534, %v530
    %v579 = vpack.c.b16 %v539, %v535
    %v580 = vpack.c.b16 %v540, %v536
    %v581 = vpack.c.b16 %v541, %v537
    %v582 = vpack.c.b16 %v542, %v538
    %v583 = vpack.c.b16 %v547, %v543
    %v584 = vpack.c.b16 %v548, %v544
    %v585 = vpack.c.b16 %v549, %v545
    %v586 = vpack.c.b16 %v550, %v546
    %v587 = vpack.c.b16 %v555, %v551
    %v588 = vpack.c.b16 %v556, %v552
    %v589 = vpack.c.b16 %v557, %v553
    %v590 = vpack.c.b16 %v558, %v554
    %623 = vmatprep.subr.bf16.mxu0 %v560
    %624 = vmatpush1.bf16.msra.mxu0 %v559
    %625 = vmatprep.subr.bf16.mxu0 %v564
    %626 = vmatpush1.bf16.msra.mxu0 %v563
    %627 = vmatprep.subr.bf16.mxu0 %v568
    %628 = vmatpush1.bf16.msra.mxu0 %v567
    %629 = vmatprep.subr.bf16.mxu0 %v572
    %630 = vmatpush1.bf16.msra.mxu0 %v571
    %631 = vmatprep.subr.bf16.mxu0 %v576
    %632 = vmatpush1.bf16.msra.mxu0 %v575
    %633 = vmatprep.subr.bf16.mxu0 %v580
    %634 = vmatpush1.bf16.msra.mxu0 %v579
    %635 = vmatprep.subr.bf16.mxu0 %v584
    %636 = vmatpush1.bf16.msra.mxu0 %v583
    %637 = vmatprep.subr.bf16.mxu0 %v588
    %638 = vmatpush1.bf16.msra.mxu0 %v587
    %639 = vmatprep.subr.bf16.mxu0 0
    %640 = vmatpush1.bf16.msra.mxu0 0
    %641 = vmatprep.subr.bf16.mxu0 0
    %642 = vmatpush1.bf16.msra.mxu0 0
    %643 = vmatprep.subr.bf16.mxu0 0
    %644 = vmatpush1.bf16.msra.mxu0 0
    %645 = vmatprep.subr.bf16.mxu0 0
    %646 = vmatpush1.bf16.msra.mxu0 0
    %647 = vmatprep.subr.bf16.mxu0 0
    %648 = vmatpush1.bf16.msra.mxu0 0
    %649 = vmatprep.subr.bf16.mxu0 0
    %650 = vmatpush1.bf16.msra.mxu0 0
    %651 = vmatprep.subr.bf16.mxu0 0
    %652 = vmatpush1.bf16.msra.mxu0 0
    %653 = vmatprep.subr.bf16.mxu0 0
    %654 = vmatpush1.bf16.msra.mxu0 0
    %655 = vmatprep.mubr.bf16.mxu0 0
    %656 = vmatmul.mubr.bf16.gmra.mrb[0].mxu0 %v430
    %v657 = vpop.f32.mrb[0].mxu0
    %v658 = vadd.f32 0.0, %v657
    %v659 = vpop.f32.mrb[0].mxu0
    %v660 = vadd.f32 0.0, %v659
    %v661 = vpop.f32.mrb[0].mxu0
    %v662 = vpop.f32.mrb[0].mxu0
    %663 = vdwg.mxu0
    %664 = vmatprep.subr.bf16.mxu0 %v562
    %665 = vmatpush1.bf16.msra.mxu0 %v561
    %666 = vmatprep.subr.bf16.mxu0 %v566
    %667 = vmatpush1.bf16.msra.mxu0 %v565
    %668 = vmatprep.subr.bf16.mxu0 %v570
    %669 = vmatpush1.bf16.msra.mxu0 %v569
    %670 = vmatprep.subr.bf16.mxu0 %v574
    %671 = vmatpush1.bf16.msra.mxu0 %v573
    %672 = vmatprep.subr.bf16.mxu0 %v578
    %673 = vmatpush1.bf16.msra.mxu0 %v577
    %674 = vmatprep.subr.bf16.mxu0 %v582
    %675 = vmatpush1.bf16.msra.mxu0 %v581
    %676 = vmatprep.subr.bf16.mxu0 %v586
    %677 = vmatpush1.bf16.msra.mxu0 %v585
    %678 = vmatprep.subr.bf16.mxu0 %v590
    %679 = vmatpush1.bf16.msra.mxu0 %v589
    %680 = vmatprep.subr.bf16.mxu0 0
    %681 = vmatpush1.bf16.msra.mxu0 0
    %682 = vmatprep.subr.bf16.mxu0 0
    %683 = vmatpush1.bf16.msra.mxu0 0
    %684 = vmatprep.subr.bf16.mxu0 0
    %685 = vmatpush1.bf16.msra.mxu0 0
    %686 = vmatprep.subr.bf16.mxu0 0
    %687 = vmatpush1.bf16.msra.mxu0 0
    %688 = vmatprep.subr.bf16.mxu0 0
    %689 = vmatpush1.bf16.msra.mxu0 0
    %690 = vmatprep.subr.bf16.mxu0 0
    %691 = vmatpush1.bf16.msra.mxu0 0
    %692 = vmatprep.subr.bf16.mxu0 0
    %693 = vmatpush1.bf16.msra.mxu0 0
    %694 = vmatprep.subr.bf16.mxu0 0
    %695 = vmatpush1.bf16.msra.mxu0 0
    %696 = vmatprep.mubr.bf16.mxu0 0
    %697 = vmatmul.mubr.bf16.gmra.mrb[0].mxu0 %v430
    %v698 = vpop.f32.mrb[0].mxu0
    %v699 = vadd.f32 0.0, %v698
    %v700 = vpop.f32.mrb[0].mxu0
    %v701 = vadd.f32 0.0, %v700
    %v702 = vpop.f32.mrb[0].mxu0
    %v703 = vpop.f32.mrb[0].mxu0
    %704 = vdwg.mxu0
    %v705 = vpack.c.bf16 %v660, %v658
    %v706 = vpack.c.bf16 %v701, %v699
    %v707 = vld [vmem:[%s2] sm:$0xf]
    %v708 = vld [vmem:[%s2 + $0x4] sm:$0xf]
    %v711 = vunpack.c.l.b16 %v707
    %v712 = vunpack.c.l.b16 %v708
    %v713 = vpack.c.b16 %v712, %v711
    %v715 = vsel %vm345, %v713, 0
    %717 = vmatprep.subr.bf16.mxu0 0
    %718 = vmatpush1.bf16.msra.mxu0 %v705
    %719 = vmatprep.subr.bf16.mxu0 0
    %720 = vmatpush1.bf16.msra.mxu0 %v706
    %721 = vmatprep.subr.bf16.mxu0 0
    %722 = vmatpush1.bf16.msra.mxu0 0
    %723 = vmatprep.subr.bf16.mxu0 0
    %724 = vmatpush1.bf16.msra.mxu0 0
    %725 = vmatprep.subr.bf16.mxu0 0
    %726 = vmatpush1.bf16.msra.mxu0 0
    %727 = vmatprep.subr.bf16.mxu0 0
    %728 = vmatpush1.bf16.msra.mxu0 0
    %729 = vmatprep.subr.bf16.mxu0 0
    %730 = vmatpush1.bf16.msra.mxu0 0
    %731 = vmatprep.subr.bf16.mxu0 0
    %732 = vmatpush1.bf16.msra.mxu0 0
    %733 = vmatprep.subr.bf16.mxu0 0
    %734 = vmatpush1.bf16.msra.mxu0 0
    %735 = vmatprep.subr.bf16.mxu0 0
    %736 = vmatpush1.bf16.msra.mxu0 0
    %737 = vmatprep.subr.bf16.mxu0 0
    %738 = vmatpush1.bf16.msra.mxu0 0
    %739 = vmatprep.subr.bf16.mxu0 0
    %740 = vmatpush1.bf16.msra.mxu0 0
    %741 = vmatprep.subr.bf16.mxu0 0
    %742 = vmatpush1.bf16.msra.mxu0 0
    %743 = vmatprep.subr.bf16.mxu0 0
    %744 = vmatpush1.bf16.msra.mxu0 0
    %745 = vmatprep.subr.bf16.mxu0 0
    %746 = vmatpush1.bf16.msra.mxu0 0
    %747 = vmatprep.subr.bf16.mxu0 0
    %748 = vmatpush1.bf16.msra.mxu0 0
    %749 = vmatprep.mubr.bf16.mxu0 0
    %750 = vmatmul.mubr.bf16.gmra.mrb[0].mxu0 %v715
    %v751 = vpop.f32.mrb[0].mxu0
    %v752 = vadd.f32 0.0, %v751
    %v753 = vpop.f32.mrb[0].mxu0
    %v754 = vpop.f32.mrb[0].mxu0
    %v755 = vadd.f32 0.0, %v754
    %v756 = vpop.f32.mrb[0].mxu0
    %757 = vdwg.mxu0
    %v758 = vadd.f32 %v752, %v755
    %v759 = vrot.slane %v758, 4
    %v760 = vadd.f32 %v758, %v759
    %v761 = vrot.slane %v760, 2
    %v762 = vadd.f32 %v760, %v761
    %v763 = vrot.slane %v762, 1
    %v764 = vadd.f32 %v762, %v763
    %v765 = vmul.f32 %v752, %v752
    %v766 = vmul.f32 %v755, %v755
    %v767 = vadd.f32 %v765, %v766
    %v768 = vrot.slane %v767, 4
    %v769 = vadd.f32 %v767, %v768
    %v770 = vrot.slane %v769, 2
    %v771 = vadd.f32 %v769, %v770
    %v772 = vrot.slane %v771, 1
    %v773 = vadd.f32 %v771, %v772
    %v774 = vsel %vm234, %v764, %v773
    %s775 = scalar_lea.vmem %s8, 128
    %v776 = vld [vmem:[%s775] sm:$0xff]
    %v777 = vld [vmem:[%s775 + $0x8] sm:$0xff]
    %v778 = vld [vmem:[%s775 + $0x10] sm:$0xff]
    %v779 = vld [vmem:[%s775 + $0x18] sm:$0xff]
    %v780 = vld [vmem:[%s775 + $0x20] sm:$0xff]
    %v781 = vld [vmem:[%s775 + $0x28] sm:$0xff]
    %v782 = vld [vmem:[%s775 + $0x30] sm:$0xff]
    %v783 = vld [vmem:[%s775 + $0x38] sm:$0xff]
    %v784 = vld [vmem:[%s775 + $0x40] sm:$0xff]
    %v785 = vld [vmem:[%s775 + $0x48] sm:$0xff]
    %v786 = vld [vmem:[%s775 + $0x50] sm:$0xff]
    %v787 = vld [vmem:[%s775 + $0x58] sm:$0xff]
    %v788 = vld [vmem:[%s775 + $0x60] sm:$0xff]
    %v789 = vld [vmem:[%s775 + $0x68] sm:$0xff]
    %v790 = vld [vmem:[%s775 + $0x70] sm:$0xff]
    %v791 = vld [vmem:[%s775 + $0x78] sm:$0xff]
    %792 = vmatprep.subr.mxu0 0.0
    %793 = vmatpush1.msra.mxu0 %v776
    %794 = vmatprep.subr.mxu0 0.0
    %795 = vmatpush1.msra.mxu0 %v777
    %796 = vmatprep.subr.mxu0 0.0
    %797 = vmatpush1.msra.mxu0 %v778
    %798 = vmatprep.subr.mxu0 0.0
    %799 = vmatpush1.msra.mxu0 %v779
    %800 = vmatprep.subr.mxu0 0.0
    %801 = vmatpush1.msra.mxu0 %v780
    %802 = vmatprep.subr.mxu0 0.0
    %803 = vmatpush1.msra.mxu0 %v781
    %804 = vmatprep.subr.mxu0 0.0
    %805 = vmatpush1.msra.mxu0 %v782
    %806 = vmatprep.subr.mxu0 0.0
    %807 = vmatpush1.msra.mxu0 %v783
    %808 = vmatprep.subr.mxu0 0.0
    %809 = vmatpush1.msra.mxu0 %v784
    %810 = vmatprep.subr.mxu0 0.0
    %811 = vmatpush1.msra.mxu0 %v785
    %812 = vmatprep.subr.mxu0 0.0
    %813 = vmatpush1.msra.mxu0 %v786
    %814 = vmatprep.subr.mxu0 0.0
    %815 = vmatpush1.msra.mxu0 %v787
    %816 = vmatprep.subr.mxu0 0.0
    %817 = vmatpush1.msra.mxu0 %v788
    %818 = vmatprep.subr.mxu0 0.0
    %819 = vmatpush1.msra.mxu0 %v789
    %820 = vmatprep.subr.mxu0 0.0
    %821 = vmatpush1.msra.mxu0 %v790
    %822 = vmatprep.subr.mxu0 0.0
    %823 = vmatpush1.msra.mxu0 %v791
    %824 = vmatprep.subr.mxu0 0.0
    %825 = vmatpush1.msra.mxu0 0.0
    %826 = vmatprep.subr.mxu0 0.0
    %827 = vmatpush1.msra.mxu0 0.0
    %828 = vmatprep.subr.mxu0 0.0
    %829 = vmatpush1.msra.mxu0 0.0
    %830 = vmatprep.subr.mxu0 0.0
    %831 = vmatpush1.msra.mxu0 0.0
    %832 = vmatprep.subr.mxu0 0.0
    %833 = vmatpush1.msra.mxu0 0.0
    %834 = vmatprep.subr.mxu0 0.0
    %835 = vmatpush1.msra.mxu0 0.0
    %836 = vmatprep.subr.mxu0 0.0
    %837 = vmatpush1.msra.mxu0 0.0
    %838 = vmatprep.subr.mxu0 0.0
    %839 = vmatpush1.msra.mxu0 0.0
    %840 = vmatprep.subr.mxu0 0.0
    %841 = vmatpush1.msra.mxu0 0.0
    %842 = vmatprep.subr.mxu0 0.0
    %843 = vmatpush1.msra.mxu0 0.0
    %844 = vmatprep.subr.mxu0 0.0
    %845 = vmatpush1.msra.mxu0 0.0
    %846 = vmatprep.subr.mxu0 0.0
    %847 = vmatpush1.msra.mxu0 0.0
    %848 = vmatprep.subr.mxu0 0.0
    %849 = vmatpush1.msra.mxu0 0.0
    %850 = vmatprep.subr.mxu0 0.0
    %851 = vmatpush1.msra.mxu0 0.0
    %852 = vmatprep.subr.mxu0 0.0
    %853 = vmatpush1.msra.mxu0 0.0
    %854 = vmatprep.subr.mxu0 0.0
    %855 = vmatpush1.msra.mxu0 0.0
    %856 = vmatprep.mubr.f32.mxu0 0.0
    %857 = vmatmul.mubr.f32.gmra.mrb[0].mxu0 %v774
    %v858 = vpop.f32.mrb[0].mxu0
    %v859 = vadd.f32 0.0, %v858
    %v860 = vpop.f32.mrb[0].mxu0
    %861 = vdwg.mxu0
    %v862 = vmul.f32 %v859, 0.0078125
    %v863 = vmul.f32 %v862, %v862
    %v865 = vrot.slane %v863, 7
    %v867 = vsub.f32 %v862, %v865
    %s868 = scalar_lea.vmem %s10, 2
    %v869 = vld [vmem:[%s868] sm:$0x3]
    %v870 = vadd.f32 %v867, 1e-05
    %v871 = vrsqrt.pop %v870
    %v873 = vrot.slane %v871, 1
    %v875 = vmul.f32 %v869, %v873
    %v876 = vmul.f32 %v862, %v875
    %v878 = vrot.slane %v876, 7
    %v880 = vsub.f32 %v869, %v878
    %v881 = vsel %vm234, %v875, %v880
    %s882 = scalar_lea.vmem %s9, 32
    %v883 = vld [vmem:[%s882] sm:$0xff]
    %v884 = vld [vmem:[%s882 + $0x8] sm:$0xff]
    %v885 = vld [vmem:[%s882 + $0x10] sm:$0xff]
    %v886 = vld [vmem:[%s882 + $0x18] sm:$0xff]
    %v888 = vsel %vm345, %v881, 0
    %890 = vmatprep.subr.mxu0 0.0
    %891 = vmatpush1.msra.mxu0 %v883
    %892 = vmatprep.subr.mxu0 0.0
    %893 = vmatpush1.msra.mxu0 %v884
    %894 = vmatprep.subr.mxu0 0.0
    %895 = vmatpush1.msra.mxu0 %v885
    %896 = vmatprep.subr.mxu0 0.0
    %897 = vmatpush1.msra.mxu0 %v886
    %898 = vmatprep.subr.mxu0 0.0
    %899 = vmatpush1.msra.mxu0 0.0
    %900 = vmatprep.subr.mxu0 0.0
    %901 = vmatpush1.msra.mxu0 0.0
    %902 = vmatprep.subr.mxu0 0.0
    %903 = vmatpush1.msra.mxu0 0.0
    %904 = vmatprep.subr.mxu0 0.0
    %905 = vmatpush1.msra.mxu0 0.0
    %906 = vmatprep.subr.mxu0 0.0
    %907 = vmatpush1.msra.mxu0 0.0
    %908 = vmatprep.subr.mxu0 0.0
    %909 = vmatpush1.msra.mxu0 0.0
    %910 = vmatprep.subr.mxu0 0.0
    %911 = vmatpush1.msra.mxu0 0.0
    %912 = vmatprep.subr.mxu0 0.0
    %913 = vmatpush1.msra.mxu0 0.0
    %914 = vmatprep.subr.mxu0 0.0
    %915 = vmatpush1.msra.mxu0 0.0
    %916 = vmatprep.subr.mxu0 0.0
    %917 = vmatpush1.msra.mxu0 0.0
    %918 = vmatprep.subr.mxu0 0.0
    %919 = vmatpush1.msra.mxu0 0.0
    %920 = vmatprep.subr.mxu0 0.0
    %921 = vmatpush1.msra.mxu0 0.0
    %922 = vmatprep.subr.mxu0 0.0
    %923 = vmatpush1.msra.mxu0 0.0
    %924 = vmatprep.subr.mxu0 0.0
    %925 = vmatpush1.msra.mxu0 0.0
    %926 = vmatprep.subr.mxu0 0.0
    %927 = vmatpush1.msra.mxu0 0.0
    %928 = vmatprep.subr.mxu0 0.0
    %929 = vmatpush1.msra.mxu0 0.0
    %930 = vmatprep.subr.mxu0 0.0
    %931 = vmatpush1.msra.mxu0 0.0
    %932 = vmatprep.subr.mxu0 0.0
    %933 = vmatpush1.msra.mxu0 0.0
    %934 = vmatprep.subr.mxu0 0.0
    %935 = vmatpush1.msra.mxu0 0.0
    %936 = vmatprep.subr.mxu0 0.0
    %937 = vmatpush1.msra.mxu0 0.0
    %938 = vmatprep.subr.mxu0 0.0
    %939 = vmatpush1.msra.mxu0 0.0
    %940 = vmatprep.subr.mxu0 0.0
    %941 = vmatpush1.msra.mxu0 0.0
    %942 = vmatprep.subr.mxu0 0.0
    %943 = vmatpush1.msra.mxu0 0.0
    %944 = vmatprep.subr.mxu0 0.0
    %945 = vmatpush1.msra.mxu0 0.0
    %946 = vmatprep.subr.mxu0 0.0
    %947 = vmatpush1.msra.mxu0 0.0
    %948 = vmatprep.subr.mxu0 0.0
    %949 = vmatpush1.msra.mxu0 0.0
    %950 = vmatprep.subr.mxu0 0.0
    %951 = vmatpush1.msra.mxu0 0.0
    %952 = vmatprep.subr.mxu0 0.0
    %953 = vmatpush1.msra.mxu0 0.0
    %954 = vmatprep.mubr.f32.mxu0 0.0
    %955 = vmatmul.mubr.f32.gmra.mrb[0].mxu0 %v888
    %v956 = vpop.f32.mrb[0].mxu0
    %v957 = vadd.f32 0.0, %v956
    %v958 = vpop.f32.mrb[0].mxu0
    %959 = vdwg.mxu0
    %v960 = vlaneseq
    %v961 = vshrl.u32 %v960, 7
    %v962 = vsub.s32 0, %v961
    %v963 = vrot.slane %v957, %v962
    %v964 = vmul.f32 %v752, %v963
    %v965 = vmul.f32 %v755, %v963
    %v966 = vlaneseq
    %v967 = vshrl.u32 %v966, 7
    %v968 = vsub.s32 1, %v967
    %v969 = vrot.slane %v957, %v968
    %v970 = vadd.f32 %v964, %v969
    %v971 = vadd.f32 %v965, %v969
    %v972 = vmax.f32 %v970, 0.0
    %v973 = vmax.f32 %v971, 0.0
    %v974 = vpack.c.bf16 %v973, %v972
    %v975 = vld [vmem:[#allocation6] sm:$0xff]
    %v976 = vld [vmem:[#allocation6 + $0x8] sm:$0xff]
    %v977 = vld [vmem:[#allocation6 + $0x10] sm:$0xff]
    %v978 = vld [vmem:[#allocation6 + $0x18] sm:$0xff]
    %v979 = vld [vmem:[#allocation6 + $0x20] sm:$0xff]
    %v980 = vld [vmem:[#allocation6 + $0x28] sm:$0xff]
    %v981 = vld [vmem:[#allocation6 + $0x30] sm:$0xff]
    %v982 = vld [vmem:[#allocation6 + $0x38] sm:$0xff]
    %v983 = vld [vmem:[#allocation6 + $0x40] sm:$0xff]
    %v984 = vld [vmem:[#allocation6 + $0x48] sm:$0xff]
    %v985 = vld [vmem:[#allocation6 + $0x50] sm:$0xff]
    %v986 = vld [vmem:[#allocation6 + $0x58] sm:$0xff]
    %v987 = vld [vmem:[#allocation6 + $0x60] sm:$0xff]
    %v988 = vld [vmem:[#allocation6 + $0x68] sm:$0xff]
    %v989 = vld [vmem:[#allocation6 + $0x70] sm:$0xff]
    %v990 = vld [vmem:[#allocation6 + $0x78] sm:$0xff]
    %v991 = vld [vmem:[#allocation6 + $0x80] sm:$0xff]
    %v992 = vld [vmem:[#allocation6 + $0x88] sm:$0xff]
    %v993 = vld [vmem:[#allocation6 + $0x90] sm:$0xff]
    %v994 = vld [vmem:[#allocation6 + $0x98] sm:$0xff]
    %v995 = vld [vmem:[#allocation6 + $0xa0] sm:$0xff]
    %v996 = vld [vmem:[#allocation6 + $0xa8] sm:$0xff]
    %v997 = vld [vmem:[#allocation6 + $0xb0] sm:$0xff]
    %v998 = vld [vmem:[#allocation6 + $0xb8] sm:$0xff]
    %v999 = vld [vmem:[#allocation6 + $0xc0] sm:$0xff]
    %v1000 = vld [vmem:[#allocation6 + $0xc8] sm:$0xff]
    %v1001 = vld [vmem:[#allocation6 + $0xd0] sm:$0xff]
    %v1002 = vld [vmem:[#allocation6 + $0xd8] sm:$0xff]
    %v1003 = vld [vmem:[#allocation6 + $0xe0] sm:$0xff]
    %v1004 = vld [vmem:[#allocation6 + $0xe8] sm:$0xff]
    %v1005 = vld [vmem:[#allocation6 + $0xf0] sm:$0xff]
    %v1006 = vld [vmem:[#allocation6 + $0xf8] sm:$0xff]
    %v1039 = vunpack.c.l.b16 %v975
    %v1040 = vunpack.c.h.b16 %v975
    %v1041 = vunpack.c.l.b16 %v976
    %v1042 = vunpack.c.h.b16 %v976
    %v1043 = vunpack.c.l.b16 %v977
    %v1044 = vunpack.c.h.b16 %v977
    %v1045 = vunpack.c.l.b16 %v978
    %v1046 = vunpack.c.h.b16 %v978
    %v1047 = vunpack.c.l.b16 %v979
    %v1048 = vunpack.c.h.b16 %v979
    %v1049 = vunpack.c.l.b16 %v980
    %v1050 = vunpack.c.h.b16 %v980
    %v1051 = vunpack.c.l.b16 %v981
    %v1052 = vunpack.c.h.b16 %v981
    %v1053 = vunpack.c.l.b16 %v982
    %v1054 = vunpack.c.h.b16 %v982
    %v1055 = vunpack.c.l.b16 %v983
    %v1056 = vunpack.c.h.b16 %v983
    %v1057 = vunpack.c.l.b16 %v984
    %v1058 = vunpack.c.h.b16 %v984
    %v1059 = vunpack.c.l.b16 %v985
    %v1060 = vunpack.c.h.b16 %v985
    %v1061 = vunpack.c.l.b16 %v986
    %v1062 = vunpack.c.h.b16 %v986
    %v1063 = vunpack.c.l.b16 %v987
    %v1064 = vunpack.c.h.b16 %v987
    %v1065 = vunpack.c.l.b16 %v988
    %v1066 = vunpack.c.h.b16 %v988
    %v1067 = vunpack.c.l.b16 %v989
    %v1068 = vunpack.c.h.b16 %v989
    %v1069 = vunpack.c.l.b16 %v990
    %v1070 = vunpack.c.h.b16 %v990
    %v1071 = vunpack.c.l.b16 %v991
    %v1072 = vunpack.c.h.b16 %v991
    %v1073 = vunpack.c.l.b16 %v992
    %v1074 = vunpack.c.h.b16 %v992
    %v1075 = vunpack.c.l.b16 %v993
    %v1076 = vunpack.c.h.b16 %v993
    %v1077 = vunpack.c.l.b16 %v994
    %v1078 = vunpack.c.h.b16 %v994
    %v1079 = vunpack.c.l.b16 %v995
    %v1080 = vunpack.c.h.b16 %v995
    %v1081 = vunpack.c.l.b16 %v996
    %v1082 = vunpack.c.h.b16 %v996
    %v1083 = vunpack.c.l.b16 %v997
    %v1084 = vunpack.c.h.b16 %v997
    %v1085 = vunpack.c.l.b16 %v998
    %v1086 = vunpack.c.h.b16 %v998
    %v1087 = vunpack.c.l.b16 %v999
    %v1088 = vunpack.c.h.b16 %v999
    %v1089 = vunpack.c.l.b16 %v1000
    %v1090 = vunpack.c.h.b16 %v1000
    %v1091 = vunpack.c.l.b16 %v1001
    %v1092 = vunpack.c.h.b16 %v1001
    %v1093 = vunpack.c.l.b16 %v1002
    %v1094 = vunpack.c.h.b16 %v1002
    %v1095 = vunpack.c.l.b16 %v1003
    %v1096 = vunpack.c.h.b16 %v1003
    %v1097 = vunpack.c.l.b16 %v1004
    %v1098 = vunpack.c.h.b16 %v1004
    %v1099 = vunpack.c.l.b16 %v1005
    %v1100 = vunpack.c.h.b16 %v1005
    %v1101 = vunpack.c.l.b16 %v1006
    %v1102 = vunpack.c.h.b16 %v1006
    %v1103 = vpack.c.b16 %v1043, %v1039
    %v1104 = vpack.c.b16 %v1044, %v1040
    %v1105 = vpack.c.b16 %v1045, %v1041
    %v1106 = vpack.c.b16 %v1046, %v1042
    %v1107 = vpack.c.b16 %v1051, %v1047
    %v1108 = vpack.c.b16 %v1052, %v1048
    %v1109 = vpack.c.b16 %v1053, %v1049
    %v1110 = vpack.c.b16 %v1054, %v1050
    %v1111 = vpack.c.b16 %v1059, %v1055
    %v1112 = vpack.c.b16 %v1060, %v1056
    %v1113 = vpack.c.b16 %v1061, %v1057
    %v1114 = vpack.c.b16 %v1062, %v1058
    %v1115 = vpack.c.b16 %v1067, %v1063
    %v1116 = vpack.c.b16 %v1068, %v1064
    %v1117 = vpack.c.b16 %v1069, %v1065
    %v1118 = vpack.c.b16 %v1070, %v1066
    %v1119 = vpack.c.b16 %v1075, %v1071
    %v1120 = vpack.c.b16 %v1076, %v1072
    %v1121 = vpack.c.b16 %v1077, %v1073
    %v1122 = vpack.c.b16 %v1078, %v1074
    %v1123 = vpack.c.b16 %v1083, %v1079
    %v1124 = vpack.c.b16 %v1084, %v1080
    %v1125 = vpack.c.b16 %v1085, %v1081
    %v1126 = vpack.c.b16 %v1086, %v1082
    %v1127 = vpack.c.b16 %v1091, %v1087
    %v1128 = vpack.c.b16 %v1092, %v1088
    %v1129 = vpack.c.b16 %v1093, %v1089
    %v1130 = vpack.c.b16 %v1094, %v1090
    %v1131 = vpack.c.b16 %v1099, %v1095
    %v1132 = vpack.c.b16 %v1100, %v1096
    %v1133 = vpack.c.b16 %v1101, %v1097
    %v1134 = vpack.c.b16 %v1102, %v1098
    %1167 = vmatprep.subr.bf16.mxu0 %v1104
    %1168 = vmatpush1.bf16.msra.mxu0 %v1103
    %1169 = vmatprep.subr.bf16.mxu0 %v1108
    %1170 = vmatpush1.bf16.msra.mxu0 %v1107
    %1171 = vmatprep.subr.bf16.mxu0 %v1112
    %1172 = vmatpush1.bf16.msra.mxu0 %v1111
    %1173 = vmatprep.subr.bf16.mxu0 %v1116
    %1174 = vmatpush1.bf16.msra.mxu0 %v1115
    %1175 = vmatprep.subr.bf16.mxu0 %v1120
    %1176 = vmatpush1.bf16.msra.mxu0 %v1119
    %1177 = vmatprep.subr.bf16.mxu0 %v1124
    %1178 = vmatpush1.bf16.msra.mxu0 %v1123
    %1179 = vmatprep.subr.bf16.mxu0 %v1128
    %1180 = vmatpush1.bf16.msra.mxu0 %v1127
    %1181 = vmatprep.subr.bf16.mxu0 %v1132
    %1182 = vmatpush1.bf16.msra.mxu0 %v1131
    %1183 = vmatprep.subr.bf16.mxu0 0
    %1184 = vmatpush1.bf16.msra.mxu0 0
    %1185 = vmatprep.subr.bf16.mxu0 0
    %1186 = vmatpush1.bf16.msra.mxu0 0
    %1187 = vmatprep.subr.bf16.mxu0 0
    %1188 = vmatpush1.bf16.msra.mxu0 0
    %1189 = vmatprep.subr.bf16.mxu0 0
    %1190 = vmatpush1.bf16.msra.mxu0 0
    %1191 = vmatprep.subr.bf16.mxu0 0
    %1192 = vmatpush1.bf16.msra.mxu0 0
    %1193 = vmatprep.subr.bf16.mxu0 0
    %1194 = vmatpush1.bf16.msra.mxu0 0
    %1195 = vmatprep.subr.bf16.mxu0 0
    %1196 = vmatpush1.bf16.msra.mxu0 0
    %1197 = vmatprep.subr.bf16.mxu0 0
    %1198 = vmatpush1.bf16.msra.mxu0 0
    %1199 = vmatprep.mubr.bf16.mxu0 0
    %1200 = vmatmul.mubr.bf16.gmra.mrb[0].mxu0 %v974
    %v1201 = vpop.f32.mrb[0].mxu0
    %v1202 = vadd.f32 0.0, %v1201
    %v1203 = vpop.f32.mrb[0].mxu0
    %v1204 = vadd.f32 0.0, %v1203
    %v1205 = vpop.f32.mrb[0].mxu0
    %v1206 = vadd.f32 0.0, %v1205
    %v1207 = vpop.f32.mrb[0].mxu0
    %v1208 = vadd.f32 0.0, %v1207
    %1209 = vdwg.mxu0
    %1210 = vmatprep.subr.bf16.mxu0 %v1106
    %1211 = vmatpush1.bf16.msra.mxu0 %v1105
    %1212 = vmatprep.subr.bf16.mxu0 %v1110
    %1213 = vmatpush1.bf16.msra.mxu0 %v1109
    %1214 = vmatprep.subr.bf16.mxu0 %v1114
    %1215 = vmatpush1.bf16.msra.mxu0 %v1113
    %1216 = vmatprep.subr.bf16.mxu0 %v1118
    %1217 = vmatpush1.bf16.msra.mxu0 %v1117
    %1218 = vmatprep.subr.bf16.mxu0 %v1122
    %1219 = vmatpush1.bf16.msra.mxu0 %v1121
    %1220 = vmatprep.subr.bf16.mxu0 %v1126
    %1221 = vmatpush1.bf16.msra.mxu0 %v1125
    %1222 = vmatprep.subr.bf16.mxu0 %v1130
    %1223 = vmatpush1.bf16.msra.mxu0 %v1129
    %1224 = vmatprep.subr.bf16.mxu0 %v1134
    %1225 = vmatpush1.bf16.msra.mxu0 %v1133
    %1226 = vmatprep.subr.bf16.mxu0 0
    %1227 = vmatpush1.bf16.msra.mxu0 0
    %1228 = vmatprep.subr.bf16.mxu0 0
    %1229 = vmatpush1.bf16.msra.mxu0 0
    %1230 = vmatprep.subr.bf16.mxu0 0
    %1231 = vmatpush1.bf16.msra.mxu0 0
    %1232 = vmatprep.subr.bf16.mxu0 0
    %1233 = vmatpush1.bf16.msra.mxu0 0
    %1234 = vmatprep.subr.bf16.mxu0 0
    %1235 = vmatpush1.bf16.msra.mxu0 0
    %1236 = vmatprep.subr.bf16.mxu0 0
    %1237 = vmatpush1.bf16.msra.mxu0 0
    %1238 = vmatprep.subr.bf16.mxu0 0
    %1239 = vmatpush1.bf16.msra.mxu0 0
    %1240 = vmatprep.subr.bf16.mxu0 0
    %1241 = vmatpush1.bf16.msra.mxu0 0
    %1242 = vmatprep.mubr.bf16.mxu0 0
    %1243 = vmatmul.mubr.bf16.gmra.mrb[0].mxu0 %v974
    %v1244 = vpop.f32.mrb[0].mxu0
    %v1245 = vadd.f32 0.0, %v1244
    %v1246 = vpop.f32.mrb[0].mxu0
    %v1247 = vadd.f32 0.0, %v1246
    %v1248 = vpop.f32.mrb[0].mxu0
    %v1249 = vadd.f32 0.0, %v1248
    %v1250 = vpop.f32.mrb[0].mxu0
    %v1251 = vadd.f32 0.0, %v1250
    %1252 = vdwg.mxu0
    %v1253 = vpack.c.bf16 %v1206, %v1202
    %v1254 = vpack.c.bf16 %v1208, %v1204
    %v1255 = vpack.c.bf16 %v1249, %v1245
    %v1256 = vpack.c.bf16 %v1251, %v1247
    %v1257 = vld [vmem:[#allocation4] sm:$0xf]
    %v1258 = vld [vmem:[#allocation4 + $0x4] sm:$0xf]
    %v1259 = vld [vmem:[#allocation4 + $0x8] sm:$0xf]
    %v1260 = vld [vmem:[#allocation4 + $0xc] sm:$0xf]
    %v1265 = vunpack.c.l.b16 %v1257
    %v1266 = vunpack.c.l.b16 %v1258
    %v1267 = vunpack.c.l.b16 %v1259
    %v1268 = vunpack.c.l.b16 %v1260
    %v1269 = vpack.c.b16 %v1266, %v1265
    %v1270 = vpack.c.b16 %v1268, %v1267
    %vm1271 = vcmask 523264
    %v1273 = vsel %vm1271, %v1269, 0
    %v1276 = vsel %vm1271, %v1270, 0
    %1278 = vmatprep.subr.bf16.mxu0 0
    %1279 = vmatpush1.bf16.msra.mxu0 %v1253
    %1280 = vmatprep.subr.bf16.mxu0 0
    %1281 = vmatpush1.bf16.msra.mxu0 %v1254
    %1282 = vmatprep.subr.bf16.mxu0 0
    %1283 = vmatpush1.bf16.msra.mxu0 %v1255
    %1284 = vmatprep.subr.bf16.mxu0 0
    %1285 = vmatpush1.bf16.msra.mxu0 %v1256
    %1286 = vmatprep.subr.bf16.mxu0 0
    %1287 = vmatpush1.bf16.msra.mxu0 0
    %1288 = vmatprep.subr.bf16.mxu0 0
    %1289 = vmatpush1.bf16.msra.mxu0 0
    %1290 = vmatprep.subr.bf16.mxu0 0
    %1291 = vmatpush1.bf16.msra.mxu0 0
    %1292 = vmatprep.subr.bf16.mxu0 0
    %1293 = vmatpush1.bf16.msra.mxu0 0
    %1294 = vmatprep.subr.bf16.mxu0 0
    %1295 = vmatpush1.bf16.msra.mxu0 0
    %1296 = vmatprep.subr.bf16.mxu0 0
    %1297 = vmatpush1.bf16.msra.mxu0 0
    %1298 = vmatprep.subr.bf16.mxu0 0
    %1299 = vmatpush1.bf16.msra.mxu0 0
    %1300 = vmatprep.subr.bf16.mxu0 0
    %1301 = vmatpush1.bf16.msra.mxu0 0
    %1302 = vmatprep.subr.bf16.mxu0 0
    %1303 = vmatpush1.bf16.msra.mxu0 0
    %1304 = vmatprep.subr.bf16.mxu0 0
    %1305 = vmatpush1.bf16.msra.mxu0 0
    %1306 = vmatprep.subr.bf16.mxu0 0
    %1307 = vmatpush1.bf16.msra.mxu0 0
    %1308 = vmatprep.subr.bf16.mxu0 0
    %1309 = vmatpush1.bf16.msra.mxu0 0
    %1310 = vmatprep.mubr.bf16.mxu0 0
    %1311 = vmatmul.mubr.bf16.gmra.mrb[0].mxu0 %v1273
    %v1312 = vpop.f32.mrb[0].mxu0
    %v1313 = vadd.f32 0.0, %v1312
    %v1314 = vpop.f32.mrb[0].mxu0
    %v1315 = vpop.f32.mrb[0].mxu0
    %v1316 = vadd.f32 0.0, %v1315
    %v1317 = vpop.f32.mrb[0].mxu0
    %1318 = vmatprep.mubr.bf16.mxu0 0
    %1319 = vmatmul.mubr.bf16.gmra.mrb[0].mxu0 %v1276
    %v1320 = vpop.f32.mrb[0].mxu0
    %v1321 = vadd.f32 0.0, %v1320
    %v1322 = vpop.f32.mrb[0].mxu0
    %v1323 = vpop.f32.mrb[0].mxu0
    %v1324 = vadd.f32 0.0, %v1323
    %v1325 = vpop.f32.mrb[0].mxu0
    %1326 = vdwg.mxu0
    %v1327 = vadd.f32 %v1313, %v1316
    %v1328 = vadd.f32 %v1327, %v1321
    %v1329 = vadd.f32 %v1328, %v1324
    %v1330 = vrot.slane %v1329, 4
    %v1331 = vadd.f32 %v1329, %v1330
    %v1332 = vrot.slane %v1331, 2
    %v1333 = vadd.f32 %v1331, %v1332
    %v1334 = vrot.slane %v1333, 1
    %v1335 = vadd.f32 %v1333, %v1334
    %v1336 = vmul.f32 %v1313, %v1313
    %v1337 = vmul.f32 %v1316, %v1316
    %v1338 = vmul.f32 %v1321, %v1321
    %v1339 = vmul.f32 %v1324, %v1324
    %v1340 = vadd.f32 %v1336, %v1337
    %v1341 = vadd.f32 %v1340, %v1338
    %v1342 = vadd.f32 %v1341, %v1339
    %v1343 = vrot.slane %v1342, 4
    %v1344 = vadd.f32 %v1342, %v1343
    %v1345 = vrot.slane %v1344, 2
    %v1346 = vadd.f32 %v1344, %v1345
    %v1347 = vrot.slane %v1346, 1
    %v1348 = vadd.f32 %v1346, %v1347
    %v1349 = vsel %vm234, %v1335, %v1348
    %s1350 = scalar_lea.vmem %s8, 256
    %v1351 = vld [vmem:[%s1350] sm:$0xff]
    %v1352 = vld [vmem:[%s1350 + $0x8] sm:$0xff]
    %v1353 = vld [vmem:[%s1350 + $0x10] sm:$0xff]
    %v1354 = vld [vmem:[%s1350 + $0x18] sm:$0xff]
    %v1355 = vld [vmem:[%s1350 + $0x20] sm:$0xff]
    %v1356 = vld [vmem:[%s1350 + $0x28] sm:$0xff]
    %v1357 = vld [vmem:[%s1350 + $0x30] sm:$0xff]
    %v1358 = vld [vmem:[%s1350 + $0x38] sm:$0xff]
    %v1359 = vld [vmem:[%s1350 + $0x40] sm:$0xff]
    %v1360 = vld [vmem:[%s1350 + $0x48] sm:$0xff]
    %v1361 = vld [vmem:[%s1350 + $0x50] sm:$0xff]
    %v1362 = vld [vmem:[%s1350 + $0x58] sm:$0xff]
    %v1363 = vld [vmem:[%s1350 + $0x60] sm:$0xff]
    %v1364 = vld [vmem:[%s1350 + $0x68] sm:$0xff]
    %v1365 = vld [vmem:[%s1350 + $0x70] sm:$0xff]
    %v1366 = vld [vmem:[%s1350 + $0x78] sm:$0xff]
    %1367 = vmatprep.subr.mxu0 0.0
    %1368 = vmatpush1.msra.mxu0 %v1351
    %1369 = vmatprep.subr.mxu0 0.0
    %1370 = vmatpush1.msra.mxu0 %v1352
    %1371 = vmatprep.subr.mxu0 0.0
    %1372 = vmatpush1.msra.mxu0 %v1353
    %1373 = vmatprep.subr.mxu0 0.0
    %1374 = vmatpush1.msra.mxu0 %v1354
    %1375 = vmatprep.subr.mxu0 0.0
    %1376 = vmatpush1.msra.mxu0 %v1355
    %1377 = vmatprep.subr.mxu0 0.0
    %1378 = vmatpush1.msra.mxu0 %v1356
    %1379 = vmatprep.subr.mxu0 0.0
    %1380 = vmatpush1.msra.mxu0 %v1357
    %1381 = vmatprep.subr.mxu0 0.0
    %1382 = vmatpush1.msra.mxu0 %v1358
    %1383 = vmatprep.subr.mxu0 0.0
    %1384 = vmatpush1.msra.mxu0 %v1359
    %1385 = vmatprep.subr.mxu0 0.0
    %1386 = vmatpush1.msra.mxu0 %v1360
    %1387 = vmatprep.subr.mxu0 0.0
    %1388 = vmatpush1.msra.mxu0 %v1361
    %1389 = vmatprep.subr.mxu0 0.0
    %1390 = vmatpush1.msra.mxu0 %v1362
    %1391 = vmatprep.subr.mxu0 0.0
    %1392 = vmatpush1.msra.mxu0 %v1363
    %1393 = vmatprep.subr.mxu0 0.0
    %1394 = vmatpush1.msra.mxu0 %v1364
    %1395 = vmatprep.subr.mxu0 0.0
    %1396 = vmatpush1.msra.mxu0 %v1365
    %1397 = vmatprep.subr.mxu0 0.0
    %1398 = vmatpush1.msra.mxu0 %v1366
    %1399 = vmatprep.subr.mxu0 0.0
    %1400 = vmatpush1.msra.mxu0 0.0
    %1401 = vmatprep.subr.mxu0 0.0
    %1402 = vmatpush1.msra.mxu0 0.0
    %1403 = vmatprep.subr.mxu0 0.0
    %1404 = vmatpush1.msra.mxu0 0.0
    %1405 = vmatprep.subr.mxu0 0.0
    %1406 = vmatpush1.msra.mxu0 0.0
    %1407 = vmatprep.subr.mxu0 0.0
    %1408 = vmatpush1.msra.mxu0 0.0
    %1409 = vmatprep.subr.mxu0 0.0
    %1410 = vmatpush1.msra.mxu0 0.0
    %1411 = vmatprep.subr.mxu0 0.0
    %1412 = vmatpush1.msra.mxu0 0.0
    %1413 = vmatprep.subr.mxu0 0.0
    %1414 = vmatpush1.msra.mxu0 0.0
    %1415 = vmatprep.subr.mxu0 0.0
    %1416 = vmatpush1.msra.mxu0 0.0
    %1417 = vmatprep.subr.mxu0 0.0
    %1418 = vmatpush1.msra.mxu0 0.0
    %1419 = vmatprep.subr.mxu0 0.0
    %1420 = vmatpush1.msra.mxu0 0.0
    %1421 = vmatprep.subr.mxu0 0.0
    %1422 = vmatpush1.msra.mxu0 0.0
    %1423 = vmatprep.subr.mxu0 0.0
    %1424 = vmatpush1.msra.mxu0 0.0
    %1425 = vmatprep.subr.mxu0 0.0
    %1426 = vmatpush1.msra.mxu0 0.0
    %1427 = vmatprep.subr.mxu0 0.0
    %1428 = vmatpush1.msra.mxu0 0.0
    %1429 = vmatprep.subr.mxu0 0.0
    %1430 = vmatpush1.msra.mxu0 0.0
    %1431 = vmatprep.mubr.f32.mxu0 0.0
    %1432 = vmatmul.mubr.f32.gmra.mrb[0].mxu0 %v1349
    %v1433 = vpop.f32.mrb[0].mxu0
    %v1434 = vadd.f32 0.0, %v1433
    %v1435 = vpop.f32.mrb[0].mxu0
    %1436 = vdwg.mxu0
    %v1437 = vmul.f32 %v1434, 0.001953125
    %v1438 = vmul.f32 %v1437, %v1437
    %v1440 = vrot.slane %v1438, 7
    %v1442 = vsub.f32 %v1437, %v1440
    %s1443 = scalar_lea.vmem %s10, 4
    %v1444 = vld [vmem:[%s1443] sm:$0x3]
    %v1445 = vadd.f32 %v1442, 1e-05
    %v1446 = vrsqrt.pop %v1445
    %v1448 = vrot.slane %v1446, 1
    %v1450 = vmul.f32 %v1444, %v1448
    %v1451 = vmul.f32 %v1437, %v1450
    %v1453 = vrot.slane %v1451, 7
    %v1455 = vsub.f32 %v1444, %v1453
    %v1456 = vsel %vm234, %v1450, %v1455
    %s1457 = scalar_lea.vmem %s9, 64
    %v1458 = vld [vmem:[%s1457] sm:$0xff]
    %v1459 = vld [vmem:[%s1457 + $0x8] sm:$0xff]
    %v1460 = vld [vmem:[%s1457 + $0x10] sm:$0xff]
    %v1461 = vld [vmem:[%s1457 + $0x18] sm:$0xff]
    %v1463 = vsel %vm345, %v1456, 0
    %1465 = vmatprep.subr.mxu0 0.0
    %1466 = vmatpush1.msra.mxu0 %v1458
    %1467 = vmatprep.subr.mxu0 0.0
    %1468 = vmatpush1.msra.mxu0 %v1459
    %1469 = vmatprep.subr.mxu0 0.0
    %1470 = vmatpush1.msra.mxu0 %v1460
    %1471 = vmatprep.subr.mxu0 0.0
    %1472 = vmatpush1.msra.mxu0 %v1461
    %1473 = vmatprep.subr.mxu0 0.0
    %1474 = vmatpush1.msra.mxu0 0.0
    %1475 = vmatprep.subr.mxu0 0.0
    %1476 = vmatpush1.msra.mxu0 0.0
    %1477 = vmatprep.subr.mxu0 0.0
    %1478 = vmatpush1.msra.mxu0 0.0
    %1479 = vmatprep.subr.mxu0 0.0
    %1480 = vmatpush1.msra.mxu0 0.0
    %1481 = vmatprep.subr.mxu0 0.0
    %1482 = vmatpush1.msra.mxu0 0.0
    %1483 = vmatprep.subr.mxu0 0.0
    %1484 = vmatpush1.msra.mxu0 0.0
    %1485 = vmatprep.subr.mxu0 0.0
    %1486 = vmatpush1.msra.mxu0 0.0
    %1487 = vmatprep.subr.mxu0 0.0
    %1488 = vmatpush1.msra.mxu0 0.0
    %1489 = vmatprep.subr.mxu0 0.0
    %1490 = vmatpush1.msra.mxu0 0.0
    %1491 = vmatprep.subr.mxu0 0.0
    %1492 = vmatpush1.msra.mxu0 0.0
    %1493 = vmatprep.subr.mxu0 0.0
    %1494 = vmatpush1.msra.mxu0 0.0
    %1495 = vmatprep.subr.mxu0 0.0
    %1496 = vmatpush1.msra.mxu0 0.0
    %1497 = vmatprep.subr.mxu0 0.0
    %1498 = vmatpush1.msra.mxu0 0.0
    %1499 = vmatprep.subr.mxu0 0.0
    %1500 = vmatpush1.msra.mxu0 0.0
    %1501 = vmatprep.subr.mxu0 0.0
    %1502 = vmatpush1.msra.mxu0 0.0
    %1503 = vmatprep.subr.mxu0 0.0
    %1504 = vmatpush1.msra.mxu0 0.0
    %1505 = vmatprep.subr.mxu0 0.0
    %1506 = vmatpush1.msra.mxu0 0.0
    %1507 = vmatprep.subr.mxu0 0.0
    %1508 = vmatpush1.msra.mxu0 0.0
    %1509 = vmatprep.subr.mxu0 0.0
    %1510 = vmatpush1.msra.mxu0 0.0
    %1511 = vmatprep.subr.mxu0 0.0
    %1512 = vmatpush1.msra.mxu0 0.0
    %1513 = vmatprep.subr.mxu0 0.0
    %1514 = vmatpush1.msra.mxu0 0.0
    %1515 = vmatprep.subr.mxu0 0.0
    %1516 = vmatpush1.msra.mxu0 0.0
    %1517 = vmatprep.subr.mxu0 0.0
    %1518 = vmatpush1.msra.mxu0 0.0
    %1519 = vmatprep.subr.mxu0 0.0
    %1520 = vmatpush1.msra.mxu0 0.0
    %1521 = vmatprep.subr.mxu0 0.0
    %1522 = vmatpush1.msra.mxu0 0.0
    %1523 = vmatprep.subr.mxu0 0.0
    %1524 = vmatpush1.msra.mxu0 0.0
    %1525 = vmatprep.subr.mxu0 0.0
    %1526 = vmatpush1.msra.mxu0 0.0
    %1527 = vmatprep.subr.mxu0 0.0
    %1528 = vmatpush1.msra.mxu0 0.0
    %1529 = vmatprep.mubr.f32.mxu0 0.0
    %1530 = vmatmul.mubr.f32.gmra.mrb[0].mxu0 %v1463
    %v1531 = vpop.f32.mrb[0].mxu0
    %v1532 = vadd.f32 0.0, %v1531
    %v1533 = vpop.f32.mrb[0].mxu0
    %1534 = vdwg.mxu0
    %v1535 = vlaneseq
    %v1536 = vshrl.u32 %v1535, 7
    %v1537 = vsub.s32 0, %v1536
    %v1538 = vrot.slane %v1532, %v1537
    %v1539 = vmul.f32 %v1313, %v1538
    %v1540 = vmul.f32 %v1316, %v1538
    %v1541 = vmul.f32 %v1321, %v1538
    %v1542 = vmul.f32 %v1324, %v1538
    %v1543 = vlaneseq
    %v1544 = vshrl.u32 %v1543, 7
    %v1545 = vsub.s32 1, %v1544
    %v1546 = vrot.slane %v1532, %v1545
    %v1547 = vadd.f32 %v1539, %v1546
    %v1548 = vadd.f32 %v1540, %v1546
    %v1549 = vadd.f32 %v1541, %v1546
    %v1550 = vadd.f32 %v1542, %v1546
    %v1551 = vmax.f32 %v1547, 0.0
    %v1552 = vmax.f32 %v1548, 0.0
    %v1553 = vmax.f32 %v1549, 0.0
    %v1554 = vmax.f32 %v1550, 0.0
    %v1555 = vpack.c.bf16 %v1552, %v1551
    %v1556 = vpack.c.bf16 %v1554, %v1553
    %v1557 = vld [vmem:[%s7] sm:$0xff]
    %v1558 = vld [vmem:[%s7 + $0x8] sm:$0xff]
    %v1559 = vld [vmem:[%s7 + $0x10] sm:$0xff]
    %v1560 = vld [vmem:[%s7 + $0x18] sm:$0xff]
    %v1561 = vld [vmem:[%s7 + $0x20] sm:$0xff]
    %v1562 = vld [vmem:[%s7 + $0x28] sm:$0xff]
    %v1563 = vld [vmem:[%s7 + $0x30] sm:$0xff]
    %v1564 = vld [vmem:[%s7 + $0x38] sm:$0xff]
    %v1565 = vld [vmem:[%s7 + $0x40] sm:$0xff]
    %v1566 = vld [vmem:[%s7 + $0x48] sm:$0xff]
    %v1567 = vld [vmem:[%s7 + $0x50] sm:$0xff]
    %v1568 = vld [vmem:[%s7 + $0x58] sm:$0xff]
    %v1569 = vld [vmem:[%s7 + $0x60] sm:$0xff]
    %v1570 = vld [vmem:[%s7 + $0x68] sm:$0xff]
    %v1571 = vld [vmem:[%s7 + $0x70] sm:$0xff]
    %v1572 = vld [vmem:[%s7 + $0x78] sm:$0xff]
    %v1589 = vunpack.c.l.b16 %v1557
    %v1590 = vunpack.c.h.b16 %v1557
    %v1591 = vunpack.c.l.b16 %v1558
    %v1592 = vunpack.c.h.b16 %v1558
    %v1593 = vunpack.c.l.b16 %v1559
    %v1594 = vunpack.c.h.b16 %v1559
    %v1595 = vunpack.c.l.b16 %v1560
    %v1596 = vunpack.c.h.b16 %v1560
    %v1597 = vunpack.c.l.b16 %v1561
    %v1598 = vunpack.c.h.b16 %v1561
    %v1599 = vunpack.c.l.b16 %v1562
    %v1600 = vunpack.c.h.b16 %v1562
    %v1601 = vunpack.c.l.b16 %v1563
    %v1602 = vunpack.c.h.b16 %v1563
    %v1603 = vunpack.c.l.b16 %v1564
    %v1604 = vunpack.c.h.b16 %v1564
    %v1605 = vunpack.c.l.b16 %v1565
    %v1606 = vunpack.c.h.b16 %v1565
    %v1607 = vunpack.c.l.b16 %v1566
    %v1608 = vunpack.c.h.b16 %v1566
    %v1609 = vunpack.c.l.b16 %v1567
    %v1610 = vunpack.c.h.b16 %v1567
    %v1611 = vunpack.c.l.b16 %v1568
    %v1612 = vunpack.c.h.b16 %v1568
    %v1613 = vunpack.c.l.b16 %v1569
    %v1614 = vunpack.c.h.b16 %v1569
    %v1615 = vunpack.c.l.b16 %v1570
    %v1616 = vunpack.c.h.b16 %v1570
    %v1617 = vunpack.c.l.b16 %v1571
    %v1618 = vunpack.c.h.b16 %v1571
    %v1619 = vunpack.c.l.b16 %v1572
    %v1620 = vunpack.c.h.b16 %v1572
    %v1621 = vpack.c.b16 %v1591, %v1589
    %v1622 = vpack.c.b16 %v1592, %v1590
    %v1623 = vpack.c.b16 %v1595, %v1593
    %v1624 = vpack.c.b16 %v1596, %v1594
    %v1625 = vpack.c.b16 %v1599, %v1597
    %v1626 = vpack.c.b16 %v1600, %v1598
    %v1627 = vpack.c.b16 %v1603, %v1601
    %v1628 = vpack.c.b16 %v1604, %v1602
    %v1629 = vpack.c.b16 %v1607, %v1605
    %v1630 = vpack.c.b16 %v1608, %v1606
    %v1631 = vpack.c.b16 %v1611, %v1609
    %v1632 = vpack.c.b16 %v1612, %v1610
    %v1633 = vpack.c.b16 %v1615, %v1613
    %v1634 = vpack.c.b16 %v1616, %v1614
    %v1635 = vpack.c.b16 %v1619, %v1617
    %v1636 = vpack.c.b16 %v1620, %v1618
    %1653 = vmatprep.subr.bf16.mxu0 %v1622
    %1654 = vmatpush1.bf16.msra.mxu0 %v1621
    %1655 = vmatprep.subr.bf16.mxu0 %v1624
    %1656 = vmatpush1.bf16.msra.mxu0 %v1623
    %1657 = vmatprep.subr.bf16.mxu0 %v1626
    %1658 = vmatpush1.bf16.msra.mxu0 %v1625
    %1659 = vmatprep.subr.bf16.mxu0 %v1628
    %1660 = vmatpush1.bf16.msra.mxu0 %v1627
    %1661 = vmatprep.subr.bf16.mxu0 %v1630
    %1662 = vmatpush1.bf16.msra.mxu0 %v1629
    %1663 = vmatprep.subr.bf16.mxu0 %v1632
    %1664 = vmatpush1.bf16.msra.mxu0 %v1631
    %1665 = vmatprep.subr.bf16.mxu0 %v1634
    %1666 = vmatpush1.bf16.msra.mxu0 %v1633
    %1667 = vmatprep.subr.bf16.mxu0 %v1636
    %1668 = vmatpush1.bf16.msra.mxu0 %v1635
    %1669 = vmatprep.subr.bf16.mxu0 0
    %1670 = vmatpush1.bf16.msra.mxu0 0
    %1671 = vmatprep.subr.bf16.mxu0 0
    %1672 = vmatpush1.bf16.msra.mxu0 0
    %1673 = vmatprep.subr.bf16.mxu0 0
    %1674 = vmatpush1.bf16.msra.mxu0 0
    %1675 = vmatprep.subr.bf16.mxu0 0
    %1676 = vmatpush1.bf16.msra.mxu0 0
    %1677 = vmatprep.subr.bf16.mxu0 0
    %1678 = vmatpush1.bf16.msra.mxu0 0
    %1679 = vmatprep.subr.bf16.mxu0 0
    %1680 = vmatpush1.bf16.msra.mxu0 0
    %1681 = vmatprep.subr.bf16.mxu0 0
    %1682 = vmatpush1.bf16.msra.mxu0 0
    %1683 = vmatprep.subr.bf16.mxu0 0
    %1684 = vmatpush1.bf16.msra.mxu0 0
    %1685 = vmatprep.mubr.bf16.mxu0 0
    %1686 = vmatmul.mubr.bf16.gmra.mrb[0].mxu0 %v1555
    %v1687 = vpop.f32.mrb[0].mxu0
    %v1688 = vadd.f32 0.0, %v1687
    %v1689 = vpop.f32.mrb[0].mxu0
    %v1690 = vadd.f32 0.0, %v1689
    %v1691 = vpop.f32.mrb[0].mxu0
    %v1692 = vadd.f32 0.0, %v1691
    %v1693 = vpop.f32.mrb[0].mxu0
    %v1694 = vadd.f32 0.0, %v1693
    %1695 = vmatprep.mubr.bf16.mxu0 0
    %1696 = vmatmul.mubr.bf16.gmra.mrb[0].mxu0 %v1556
    %v1697 = vpop.f32.mrb[0].mxu0
    %v1698 = vadd.f32 0.0, %v1697
    %v1699 = vpop.f32.mrb[0].mxu0
    %v1700 = vadd.f32 0.0, %v1699
    %v1701 = vpop.f32.mrb[0].mxu0
    %v1702 = vadd.f32 0.0, %v1701
    %v1703 = vpop.f32.mrb[0].mxu0
    %v1704 = vadd.f32 0.0, %v1703
    %1705 = vdwg.mxu0
    %v1706 = vpack.c.bf16 %v1692, %v1688
    %v1707 = vpack.c.bf16 %v1702, %v1698
    %v1708 = vpack.c.bf16 %v1694, %v1690
    %v1709 = vpack.c.bf16 %v1704, %v1700
    %v1710 = vld [vmem:[#allocation7] sm:$0xf]
    %v1711 = vld [vmem:[#allocation7 + $0x4] sm:$0xf]
    %v1712 = vld [vmem:[#allocation7 + $0x8] sm:$0xf]
    %v1713 = vld [vmem:[#allocation7 + $0xc] sm:$0xf]
    %v1714 = vld [vmem:[#allocation7 + $0x10] sm:$0xf]
    %v1715 = vld [vmem:[#allocation7 + $0x14] sm:$0xf]
    %v1716 = vld [vmem:[#allocation7 + $0x18] sm:$0xf]
    %v1724 = vunpack.c.l.b16 %v1710
    %v1725 = vunpack.c.l.b16 %v1711
    %v1726 = vunpack.c.l.b16 %v1712
    %v1727 = vunpack.c.l.b16 %v1713
    %v1728 = vunpack.c.l.b16 %v1714
    %v1729 = vunpack.c.l.b16 %v1715
    %v1730 = vunpack.c.l.b16 %v1716
    %v1731 = vpack.c.b16 %v1725, %v1724
    %v1732 = vpack.c.b16 %v1727, %v1726
    %v1733 = vpack.c.b16 %v1729, %v1728
    %v1734 = vpack.c.b16 %v1730, %v1730
    %v1736 = vsel %vm1271, %v1731, 0
    %v1739 = vsel %vm1271, %v1732, 0
    %v1742 = vsel %vm1271, %v1733, 0
    %v1745 = vsel %vm1271, %v1734, 0
    %1747 = vmatprep.subr.bf16.mxu0 0
    %1748 = vmatpush1.bf16.msra.mxu0 %v1706
    %1749 = vmatprep.subr.bf16.mxu0 0
    %1750 = vmatpush1.bf16.msra.mxu0 %v1707
    %1751 = vmatprep.subr.bf16.mxu0 0
    %1752 = vmatpush1.bf16.msra.mxu0 %v1708
    %1753 = vmatprep.subr.bf16.mxu0 0
    %1754 = vmatpush1.bf16.msra.mxu0 %v1709
    %1755 = vmatprep.subr.bf16.mxu0 0
    %1756 = vmatpush1.bf16.msra.mxu0 0
    %1757 = vmatprep.subr.bf16.mxu0 0
    %1758 = vmatpush1.bf16.msra.mxu0 0
    %1759 = vmatprep.subr.bf16.mxu0 0
    %1760 = vmatpush1.bf16.msra.mxu0 0
    %1761 = vmatprep.subr.bf16.mxu0 0
    %1762 = vmatpush1.bf16.msra.mxu0 0
    %1763 = vmatprep.subr.bf16.mxu0 0
    %1764 = vmatpush1.bf16.msra.mxu0 0
    %1765 = vmatprep.subr.bf16.mxu0 0
    %1766 = vmatpush1.bf16.msra.mxu0 0
    %1767 = vmatprep.subr.bf16.mxu0 0
    %1768 = vmatpush1.bf16.msra.mxu0 0
    %1769 = vmatprep.subr.bf16.mxu0 0
    %1770 = vmatpush1.bf16.msra.mxu0 0
    %1771 = vmatprep.subr.bf16.mxu0 0
    %1772 = vmatpush1.bf16.msra.mxu0 0
    %1773 = vmatprep.subr.bf16.mxu0 0
    %1774 = vmatpush1.bf16.msra.mxu0 0
    %1775 = vmatprep.subr.bf16.mxu0 0
    %1776 = vmatpush1.bf16.msra.mxu0 0
    %1777 = vmatprep.subr.bf16.mxu0 0
    %1778 = vmatpush1.bf16.msra.mxu0 0
    %1779 = vmatprep.mubr.bf16.mxu0 0
    %1780 = vmatmul.mubr.bf16.gmra.mrb[0].mxu0 %v1736
    %v1781 = vpop.f32.mrb[0].mxu0
    %v1782 = vadd.f32 0.0, %v1781
    %v1783 = vpop.f32.mrb[0].mxu0
    %v1784 = vpop.f32.mrb[0].mxu0
    %v1785 = vadd.f32 0.0, %v1784
    %v1786 = vpop.f32.mrb[0].mxu0
    %1787 = vmatprep.mubr.bf16.mxu0 0
    %1788 = vmatmul.mubr.bf16.gmra.mrb[0].mxu0 %v1739
    %v1789 = vpop.f32.mrb[0].mxu0
    %v1790 = vadd.f32 0.0, %v1789
    %v1791 = vpop.f32.mrb[0].mxu0
    %v1792 = vpop.f32.mrb[0].mxu0
    %v1793 = vadd.f32 0.0, %v1792
    %v1794 = vpop.f32.mrb[0].mxu0
    %1795 = vmatprep.mubr.bf16.mxu0 0
    %1796 = vmatmul.mubr.bf16.gmra.mrb[0].mxu0 %v1742
    %v1797 = vpop.f32.mrb[0].mxu0
    %v1798 = vadd.f32 0.0, %v1797
    %v1799 = vpop.f32.mrb[0].mxu0
    %v1800 = vpop.f32.mrb[0].mxu0
    %v1801 = vadd.f32 0.0, %v1800
    %v1802 = vpop.f32.mrb[0].mxu0
    %1803 = vmatprep.mubr.bf16.mxu0 0
    %1804 = vmatmul.mubr.bf16.gmra.mrb[0].mxu0 %v1745
    %v1805 = vpop.f32.mrb[0].mxu0
    %v1806 = vadd.f32 0.0, %v1805
    %v1807 = vpop.f32.mrb[0].mxu0
    %v1808 = vpop.f32.mrb[0].mxu0
    %v1809 = vpop.f32.mrb[0].mxu0
    %1810 = vdwg.mxu0
    %v1811 = vtanh.pop %v1782
    %v1812 = vtanh.pop %v1785
    %v1813 = vtanh.pop %v1790
    %v1814 = vtanh.pop %v1793
    %v1815 = vtanh.pop %v1798
    %v1816 = vtanh.pop %v1801
    %v1817 = vtanh.pop %v1806
    %1818 = vst [vmem:[%s11] sm:$0xff] %v1811
    %1819 = vst [vmem:[%s11 + $0x8] sm:$0xff] %v1812
    %1820 = vst [vmem:[%s11 + $0x10] sm:$0xff] %v1813
    %1821 = vst [vmem:[%s11 + $0x18] sm:$0xff] %v1814
    %1822 = vst [vmem:[%s11 + $0x20] sm:$0xff] %v1815
    %1823 = vst [vmem:[%s11 + $0x28] sm:$0xff] %v1816
    %1824 = vst [vmem:[%s11 + $0x30] sm:$0xff] %v1817
    // Predicated region
    $region62: #{_generator_apply.1} parent=1 // pred_check
      _
    $region63: #{_generator_apply.1} parent=1 // pred_check_branch
      %1826 = sbr.rel (0) target = $region65
    $region64: #{_generator_apply.1} parent=1 // pred_region
      _
    $region65: #{_generator_apply.1} parent=1 // pred_fallthru
      _
    // Predicated region
    $region66: #{_generator_apply.1} parent=1 // pred_check
      _
    $region67: #{_generator_apply.1} parent=1 // pred_check_branch
      %1828 = sbr.rel (0) target = $region69
    $region68: #{_generator_apply.1} parent=1 // pred_region
      _
    $region69: #{_generator_apply.1} parent=1 // pred_fallthru
      _
    %1829 = vsyncpa [#allocation3], 1
    %1830 = vsyncpa [#allocation5], 1
    %1831 = vsyncpa [#allocation8], 1

</llo_original>
